<compile_context>
chip_gen: v7x
topology: tpu7x:2x2x1
jax: 0.10.0
libtpu: 0.0.40
codegen_flags: <defaults>
</compile_context>

<pallas_src>
import math

import jax
import jax.numpy as jnp
from jax.experimental import pallas as pl
from jax.experimental.pallas import tpu as pltpu

VOCAB = 64
EMBED = 32
HEADS = 4
HEAD_DIM = EMBED // HEADS
FFN = 2048          # PyTorch TransformerEncoderLayer default dim_feedforward
EPS = 1e-5          # PyTorch LayerNorm default eps
N = 2               # batch
T = 8               # sequence length
ROWS = N * T
LANES = 128         # lane-dense width (slab width and padded vocab head)

# --- packed parameter slab row offsets (all multiples of 8 -> aligned loads) ---
R_WQKV = 0                    # (EMBED, 128): [scale*Wq | Wk | Wv | 0]
R_WO = R_WQKV + EMBED         # (EMBED, 128): out_proj weight (lanes 0:E used)
R_HSUM = R_WO + EMBED         # (EMBED, 128): block head-sum matrix
R_WOUT = R_HSUM + EMBED       # (EMBED, 128): vocab head, LN2 affine folded in
R_VEC = R_WOUT + EMBED        # 8 bias / gain rows (see order below)
SLAB_ROWS = R_VEC + 8         # 136 rows x 128 lanes f32  (= 68 KiB)
# vec-row order: 0 bqkv | 1 bo | 2 ln1w | 3 ln1b | 4 b2 | 5 bout | 6,7 pad


def _layernorm(x, w, b):
    mu = jnp.mean(x, axis=-1, keepdims=True)
    var = jnp.mean((x - mu) ** 2, axis=-1, keepdims=True)
    return (x - mu) * jax.lax.rsqrt(var + EPS) * w + b


def transformer_kernel(ids_ref, emb_ref, slab_ref, b1_ref, w1_ref, w2_ref,
                       out_ref):
    f32 = jnp.float32

    # --- unpack the parameter slab (aligned full-width loads, jnp slices) ---
    wqkv = slab_ref[R_WQKV:R_WQKV + EMBED, :]            # (E,128)
    wo = slab_ref[R_WO:R_WO + EMBED, :][:, :EMBED]       # (E,E)
    hsum = slab_ref[R_HSUM:R_HSUM + EMBED, :][:, :EMBED]  # (E,E)
    wout = slab_ref[R_WOUT:R_WOUT + EMBED, :]            # (E,128)
    vec = slab_ref[R_VEC:R_VEC + 8, :]                   # (8,128)
    bqkv = vec[0:1, :]                                   # (1,128)
    bo = vec[1:2, :EMBED]
    ln1w = vec[2:3, :EMBED]
    ln1b = vec[3:4, :EMBED]
    b2 = vec[4:5, :EMBED]
    bout = vec[5:6, :]                                   # (1,128)

    # --- embedding gather + positional encoding fused into ONE one-hot matmul:
    #     one-hot over (VOCAB token lanes | T position lanes) x [emb ; pe] table
    ids = ids_ref[...]                                               # (ROWS,1) i32
    lane = jax.lax.broadcasted_iota(jnp.int32, (ROWS, VOCAB + T), 1)
    pos = jax.lax.broadcasted_iota(jnp.int32, (ROWS, VOCAB + T), 0) % T
    onehot = jnp.logical_or(lane == ids, lane == VOCAB + pos).astype(f32)
    h = jnp.dot(onehot, emb_ref[...], preferred_element_type=f32)    # (ROWS,E)

    # --- fused QKV projection (1/sqrt(Dh) already folded into Wq/bq) ---
    qkv = jnp.dot(h, wqkv, preferred_element_type=f32) + bqkv        # (ROWS,128)
    q = qkv[:, :EMBED]
    k = qkv[:, EMBED:2 * EMBED]
    v = qkv[:, 2 * EMBED:3 * EMBED]

    # --- multi-head self-attention over the N=2 axis (batch_first=False) ---
    # Partner row = same torch position in the other batch element; with the
    # n-major layout that is a circular roll by T over the 16 rows.
    k_p = pltpu.roll(k, shift=T, axis=0)
    v_p = pltpu.roll(v, shift=T, axis=0)
    # per-head (s_self - s_cross), broadcast across each head's dims via the
    # block head-sum matrix hsum[i,j] = (i//HEAD_DIM == j//HEAD_DIM)
    d = jnp.dot(q * (k - k_p), hsum, preferred_element_type=f32)
    # 2-way softmax: p_self = exp(ss)/(exp(ss)+exp(sc)) = sigmoid(ss - sc)
    p_self = pl.reciprocal(1.0 + jnp.exp(-d), approx=True)
    attn = v_p + p_self * (v - v_p)                                  # (ROWS,E)
    attn = jnp.dot(attn, wo, preferred_element_type=f32) + bo

    # --- residual + LayerNorm 1 (post-LN; dropout = identity in eval) ---
    x1 = _layernorm(h + attn, ln1w, ln1b)

    # --- feed-forward: bf16 operands on the MXU, f32 accumulation/elementwise ---
    ff = jnp.dot(x1.astype(jnp.bfloat16), w1_ref[...],
                 preferred_element_type=f32) + b1_ref[...]
    ff = jnp.maximum(ff, 0.0)
    ff = jnp.dot(ff.astype(jnp.bfloat16), w2_ref[...],
                 preferred_element_type=f32) + b2

    # --- residual + LayerNorm 2 normalize (affine folded into wout/bout) ---
    y = x1 + ff
    mu = jnp.mean(y, axis=-1, keepdims=True)
    var = jnp.mean((y - mu) ** 2, axis=-1, keepdims=True)
    x2 = (y - mu) * jax.lax.rsqrt(var + EPS)

    # --- vocab head (padded to 128 lanes -> unmasked lane-dense store) ---
    out_ref[...] = jnp.dot(x2, wout, preferred_element_type=f32) + bout


def init_params(key):
    ks = jax.random.split(key, 12)
    sc = 0.1
    p = {
        "embed":      jax.random.normal(ks[0], (VOCAB, EMBED), jnp.float32),
        "pos":        jax.random.normal(ks[1], (1, 100, EMBED), jnp.float32),
        "in_proj_w":  jax.random.normal(ks[2], (3 * EMBED, EMBED), jnp.float32) * sc,
        "in_proj_b":  jax.random.normal(ks[3], (3 * EMBED,), jnp.float32) * sc,
        "out_proj_w": jax.random.normal(ks[4], (EMBED, EMBED), jnp.float32) * sc,
        "out_proj_b": jax.random.normal(ks[5], (EMBED,), jnp.float32) * sc,
        "lin1_w":     jax.random.normal(ks[6], (FFN, EMBED), jnp.float32) * sc,
        "lin1_b":     jax.random.normal(ks[7], (FFN,), jnp.float32) * sc,
        "lin2_w":     jax.random.normal(ks[8], (EMBED, FFN), jnp.float32) * sc,
        "lin2_b":     jax.random.normal(ks[9], (EMBED,), jnp.float32) * sc,
        "ln1_w":      jnp.ones((EMBED,), jnp.float32),
        "ln1_b":      jnp.zeros((EMBED,), jnp.float32),
        "ln2_w":      jnp.ones((EMBED,), jnp.float32),
        "ln2_b":      jnp.zeros((EMBED,), jnp.float32),
        "out_w":      jax.random.normal(ks[10], (VOCAB, EMBED), jnp.float32) * sc,
        "out_b":      jax.random.normal(ks[11], (VOCAB,), jnp.float32) * sc,
    }
    return p


def prepare_params(p):
    """One-time, weight-only prep (run OUTSIDE the per-call jitted path)."""
    E = EMBED
    scale = 1.0 / math.sqrt(HEAD_DIM)

    def pad_lanes(a):
        return jnp.pad(a, ((0, 0), (0, LANES - a.shape[1])))

    # [embedding ; positional] table for the fused one-hot matmul
    pe = p["pos"][0, :T, :]                                          # (T,E)
    emb_pe = jnp.concatenate([p["embed"], pe], axis=0)               # (VOCAB+T,E)

    # fused QKV weight/bias, attention scale folded into Wq/bq
    wq = p["in_proj_w"][:E].T * scale
    wk = p["in_proj_w"][E:2 * E].T
    wv = p["in_proj_w"][2 * E:].T
    wqkv = pad_lanes(jnp.concatenate([wq, wk, wv], axis=1))          # (E,128)
    bqkv = jnp.concatenate([p["in_proj_b"][:E] * scale, p["in_proj_b"][E:]])
    bqkv = jnp.pad(bqkv, (0, LANES - 3 * E)).reshape(1, LANES)

    wo = pad_lanes(p["out_proj_w"].T)                                # (E,128)
    bo = jnp.pad(p["out_proj_b"], (0, LANES - E)).reshape(1, LANES)

    # block head-sum matrix hsum[i,j] = (i//HEAD_DIM == j//HEAD_DIM)
    hid = jnp.arange(E) // HEAD_DIM
    hsum = pad_lanes((hid[:, None] == hid[None, :]).astype(jnp.float32))

    # vocab head padded to 128 lanes, LayerNorm-2 affine folded in:
    #   wout' = diag(ln2w) @ wout ;  bout' = ln2b @ wout + bout
    wout = jnp.pad(p["out_w"].T, ((0, 0), (0, LANES - VOCAB)))       # (E,128)
    bout = jnp.pad(p["out_b"], (0, LANES - VOCAB))
    wout_f = p["ln2_w"][:, None] * wout
    bout_f = (p["ln2_b"] @ wout + bout).reshape(1, LANES)

    ln1w = jnp.pad(p["ln1_w"], (0, LANES - E)).reshape(1, LANES)
    ln1b = jnp.pad(p["ln1_b"], (0, LANES - E)).reshape(1, LANES)
    b2 = jnp.pad(p["lin2_b"], (0, LANES - E)).reshape(1, LANES)

    vec_rows = jnp.concatenate(
        [bqkv, bo, ln1w, ln1b, b2, bout_f,
         jnp.zeros((2, LANES), jnp.float32)], axis=0)                # (8,128)
    slab = jnp.concatenate([wqkv, wo, hsum, wout_f, vec_rows], axis=0)
    assert slab.shape == (SLAB_ROWS, LANES)

    return {
        "emb_pe": emb_pe,
        "slab": slab,
        "b1": p["lin1_b"].reshape(1, FFN),
        "w1": p["lin1_w"].T.astype(jnp.bfloat16),                    # (E,FFN)
        "w2": p["lin2_w"].T.astype(jnp.bfloat16),                    # (FFN,E)
    }


def minimal_transformer(x_tokens, kp):
    """x_tokens: int32 [N, T]; kp: prepare_params() output -> logits [N,T,VOCAB]."""
    # activation-path glue is just a (free) reshape: rows are n-major (n*T + t)
    ids = x_tokens.astype(jnp.int32).reshape(ROWS, 1)

    flops = 2 * ROWS * ((VOCAB + T) * EMBED + EMBED * LANES + 2 * EMBED * EMBED
                        + 2 * EMBED * FFN + EMBED * LANES)
    cost = pl.CostEstimate(flops=flops,
                           transcendentals=ROWS * (2 * EMBED + 2),
                           bytes_accessed=350_000)

    out = pl.pallas_call(
        transformer_kernel,
        out_shape=jax.ShapeDtypeStruct((ROWS, LANES), jnp.float32),
        in_specs=[pl.BlockSpec(memory_space=pltpu.MemorySpace.VMEM)] * 6,
        out_specs=pl.BlockSpec(memory_space=pltpu.MemorySpace.VMEM),
        cost_estimate=cost,
    )(ids, kp["emb_pe"], kp["slab"], kp["b1"], kp["w1"], kp["w2"])

    # back to PyTorch output layout (N, T, VOCAB)
    return out[:, :VOCAB].reshape(N, T, VOCAB)


if __name__ == "__main__":
    key = jax.random.PRNGKey(0)
    k_tok, k_par = jax.random.split(key)
    x = jax.random.randint(k_tok, (N, T), 0, VOCAB, dtype=jnp.int32)
    params = init_params(k_par)

    kernel_params = jax.tree_util.tree_map(jax.block_until_ready,
                                           prepare_params(params))  # one-time prep

    fwd = jax.jit(minimal_transformer)
    logits = fwd(x, kernel_params)
    jax.block_until_ready(logits)
    assert logits.shape == (N, T, VOCAB) and logits.dtype == jnp.float32
    assert bool(jnp.all(jnp.isfinite(logits)))
    print("KERNEL_OK")
</pallas_src>

<mosaic_0001>
module attributes {stable_mosaic.version = 11 : i64} {
  func.func @transformer_kernel(%arg0: memref<16x1xi32, #tpu.memory_space<vmem>>, %arg1: memref<72x32xf32, #tpu.memory_space<vmem>>, %arg2: memref<136x128xf32, #tpu.memory_space<vmem>>, %arg3: memref<1x2048xf32, #tpu.memory_space<vmem>>, %arg4: memref<32x2048xbf16, #tpu.memory_space<vmem>>, %arg5: memref<2048x32xbf16, #tpu.memory_space<vmem>>, %arg6: memref<16x128xf32, #tpu.memory_space<vmem>>) attributes {dimension_semantics = [], scalar_prefetch = 0 : i64, scratch_operands = 0 : i64, tpu.core_type = #tpu.core_type<tc>} {
    %c0 = arith.constant 0 : index
    %c0_0 = arith.constant 0 : index
    %0 = vector.load %arg2[%c0, %c0_0] : memref<136x128xf32, #tpu.memory_space<vmem>>, vector<32x128xf32>
    %c32 = arith.constant 32 : index
    %c0_1 = arith.constant 0 : index
    %1 = vector.load %arg2[%c32, %c0_1] : memref<136x128xf32, #tpu.memory_space<vmem>>, vector<32x128xf32>
    %2 = vector.extract_strided_slice %1 {offsets = [0, 0], sizes = [32, 32], strides = [1, 1]} : vector<32x128xf32> to vector<32x32xf32>
    %c64 = arith.constant 64 : index
    %c0_2 = arith.constant 0 : index
    %3 = vector.load %arg2[%c64, %c0_2] : memref<136x128xf32, #tpu.memory_space<vmem>>, vector<32x128xf32>
    %4 = vector.extract_strided_slice %3 {offsets = [0, 0], sizes = [32, 32], strides = [1, 1]} : vector<32x128xf32> to vector<32x32xf32>
    %c96 = arith.constant 96 : index
    %c0_3 = arith.constant 0 : index
    %5 = vector.load %arg2[%c96, %c0_3] : memref<136x128xf32, #tpu.memory_space<vmem>>, vector<32x128xf32>
    %c128 = arith.constant 128 : index
    %c0_4 = arith.constant 0 : index
    %6 = vector.load %arg2[%c128, %c0_4] : memref<136x128xf32, #tpu.memory_space<vmem>>, vector<8x128xf32>
    %7 = vector.extract_strided_slice %6 {offsets = [0, 0], sizes = [1, 128], strides = [1, 1]} : vector<8x128xf32> to vector<1x128xf32>
    %8 = vector.extract_strided_slice %6 {offsets = [1, 0], sizes = [1, 32], strides = [1, 1]} : vector<8x128xf32> to vector<1x32xf32>
    %9 = vector.extract_strided_slice %6 {offsets = [2, 0], sizes = [1, 32], strides = [1, 1]} : vector<8x128xf32> to vector<1x32xf32>
    %10 = vector.extract_strided_slice %6 {offsets = [3, 0], sizes = [1, 32], strides = [1, 1]} : vector<8x128xf32> to vector<1x32xf32>
    %11 = vector.extract_strided_slice %6 {offsets = [4, 0], sizes = [1, 32], strides = [1, 1]} : vector<8x128xf32> to vector<1x32xf32>
    %12 = vector.extract_strided_slice %6 {offsets = [5, 0], sizes = [1, 128], strides = [1, 1]} : vector<8x128xf32> to vector<1x128xf32>
    %c0_5 = arith.constant 0 : index
    %c0_6 = arith.constant 0 : index
    %13 = vector.load %arg0[%c0_5, %c0_6] : memref<16x1xi32, #tpu.memory_space<vmem>>, vector<16x1xi32>
    %14 = tpu.iota {dimensions = array<i32: 1>} : vector<16x72xi32>
    %15 = tpu.iota {dimensions = array<i32: 0>} : vector<16x72xi32>
    %c8_i32 = arith.constant 8 : i32
    %c0_i32 = arith.constant 0 : i32
    %16 = arith.cmpi eq, %c8_i32, %c0_i32 : i32
    %c1_i32 = arith.constant 1 : i32
    %17 = arith.select %16, %c1_i32, %c8_i32 : i32
    %18 = vector.broadcast %17 : i32 to vector<16x72xi32>
    %19 = arith.remsi %15, %18 : vector<16x72xi32>
    %c0_i32_7 = arith.constant 0 : i32
    %20 = vector.broadcast %c0_i32_7 : i32 to vector<16x72xi32>
    %21 = arith.cmpi ne, %19, %20 : vector<16x72xi32>
    %c0_i32_8 = arith.constant 0 : i32
    %22 = vector.broadcast %c0_i32_8 : i32 to vector<16x72xi32>
    %23 = arith.cmpi slt, %19, %22 : vector<16x72xi32>
    %c0_i32_9 = arith.constant 0 : i32
    %24 = arith.cmpi slt, %17, %c0_i32_9 : i32
    %25 = vector.broadcast %24 : i1 to vector<16x72xi1>
    %26 = vector.broadcast %25 : vector<16x72xi1> to vector<16x72xi1>
    %27 = arith.xori %23, %26 : vector<16x72xi1>
    %28 = arith.andi %27, %21 : vector<16x72xi1>
    %29 = vector.broadcast %17 : i32 to vector<16x72xi32>
    %30 = arith.addi %19, %29 : vector<16x72xi32>
    %31 = arith.select %28, %30, %19 : vector<16x72xi1>, vector<16x72xi32>
    %32 = vector.broadcast %13 : vector<16x1xi32> to vector<16x72xi32>
    %33 = arith.cmpi eq, %14, %32 : vector<16x72xi32>
    %c64_i32 = arith.constant 64 : i32
    %34 = vector.broadcast %c64_i32 : i32 to vector<16x72xi32>
    %35 = arith.addi %34, %31 : vector<16x72xi32>
    %36 = arith.cmpi eq, %14, %35 : vector<16x72xi32>
    %37 = arith.ori %33, %36 : vector<16x72xi1>
    %38 = arith.extui %37 : vector<16x72xi1> to vector<16x72xi32>
    %39 = arith.sitofp %38 : vector<16x72xi32> to vector<16x72xf32>
    %c0_10 = arith.constant 0 : index
    %c0_11 = arith.constant 0 : index
    %40 = vector.load %arg1[%c0_10, %c0_11] : memref<72x32xf32, #tpu.memory_space<vmem>>, vector<72x32xf32>
    %cst = arith.constant dense<0.000000e+00> : vector<16x32xf32>
    %41 = tpu.matmul %39, %40, %cst {dimension_numbers = #tpu.dot_dimension_numbers<[1], [0], [0], [1], [0, 0, 1, 1], [], []>} : vector<16x72xf32>, vector<72x32xf32>, vector<16x32xf32> -> vector<16x32xf32>
    %cst_12 = arith.constant dense<0.000000e+00> : vector<16x128xf32>
    %42 = tpu.matmul %41, %0, %cst_12 {dimension_numbers = #tpu.dot_dimension_numbers<[1], [0], [0], [1], [0, 0, 1, 1], [], []>} : vector<16x32xf32>, vector<32x128xf32>, vector<16x128xf32> -> vector<16x128xf32>
    %43 = vector.broadcast %7 : vector<1x128xf32> to vector<16x128xf32>
    %44 = arith.addf %42, %43 : vector<16x128xf32>
    %45 = vector.extract_strided_slice %44 {offsets = [0, 0], sizes = [16, 32], strides = [1, 1]} : vector<16x128xf32> to vector<16x32xf32>
    %46 = vector.extract_strided_slice %44 {offsets = [0, 32], sizes = [16, 32], strides = [1, 1]} : vector<16x128xf32> to vector<16x32xf32>
    %47 = vector.extract_strided_slice %44 {offsets = [0, 64], sizes = [16, 32], strides = [1, 1]} : vector<16x128xf32> to vector<16x32xf32>
    %c8_i32_13 = arith.constant 8 : i32
    %48 = tpu.dynamic_rotate %46 by %c8_i32_13 dim 0 : vector<16x32xf32>, i32 -> vector<16x32xf32>
    %c8_i32_14 = arith.constant 8 : i32
    %49 = tpu.dynamic_rotate %47 by %c8_i32_14 dim 0 : vector<16x32xf32>, i32 -> vector<16x32xf32>
    %50 = arith.subf %46, %48 : vector<16x32xf32>
    %51 = arith.mulf %45, %50 : vector<16x32xf32>
    %cst_15 = arith.constant dense<0.000000e+00> : vector<16x32xf32>
    %52 = tpu.matmul %51, %4, %cst_15 {dimension_numbers = #tpu.dot_dimension_numbers<[1], [0], [0], [1], [0, 0, 1, 1], [], []>} : vector<16x32xf32>, vector<32x32xf32>, vector<16x32xf32> -> vector<16x32xf32>
    %cst_16 = arith.constant 0.000000e+00 : f32
    %53 = vector.broadcast %cst_16 : f32 to vector<16x32xf32>
    %54 = arith.subf %53, %52 : vector<16x32xf32>
    %55 = math.exp %54 : vector<16x32xf32>
    %cst_17 = arith.constant 1.000000e+00 : f32
    %56 = vector.broadcast %cst_17 : f32 to vector<16x32xf32>
    %57 = arith.addf %56, %55 : vector<16x32xf32>
    %58 = tpu.reciprocal %57 {approx = true} : vector<16x32xf32> -> vector<16x32xf32>
    %59 = arith.subf %47, %49 : vector<16x32xf32>
    %60 = arith.mulf %58, %59 : vector<16x32xf32>
    %61 = arith.addf %49, %60 : vector<16x32xf32>
    %cst_18 = arith.constant dense<0.000000e+00> : vector<16x32xf32>
    %62 = tpu.matmul %61, %2, %cst_18 {dimension_numbers = #tpu.dot_dimension_numbers<[1], [0], [0], [1], [0, 0, 1, 1], [], []>} : vector<16x32xf32>, vector<32x32xf32>, vector<16x32xf32> -> vector<16x32xf32>
    %63 = vector.broadcast %8 : vector<1x32xf32> to vector<16x32xf32>
    %64 = arith.addf %62, %63 : vector<16x32xf32>
    %65 = arith.addf %41, %64 : vector<16x32xf32>
    %cst_19 = arith.constant dense<0.000000e+00> : vector<16xf32>
    %66 = vector.multi_reduction <add>, %65, %cst_19 [1] : vector<16x32xf32> to vector<16xf32>
    %67 = vector.shape_cast %66 : vector<16xf32> to vector<16x1xf32>
    %cst_20 = arith.constant 3.200000e+01 : f32
    %68 = vector.broadcast %cst_20 : f32 to vector<16x1xf32>
    %69 = arith.divf %67, %68 : vector<16x1xf32>
    %70 = vector.broadcast %69 : vector<16x1xf32> to vector<16x32xf32>
    %71 = arith.subf %65, %70 : vector<16x32xf32>
    %72 = arith.mulf %71, %71 : vector<16x32xf32>
    %cst_21 = arith.constant dense<0.000000e+00> : vector<16xf32>
    %73 = vector.multi_reduction <add>, %72, %cst_21 [1] : vector<16x32xf32> to vector<16xf32>
    %74 = vector.shape_cast %73 : vector<16xf32> to vector<16x1xf32>
    %cst_22 = arith.constant 3.200000e+01 : f32
    %75 = vector.broadcast %cst_22 : f32 to vector<16x1xf32>
    %76 = arith.divf %74, %75 : vector<16x1xf32>
    %77 = vector.broadcast %69 : vector<16x1xf32> to vector<16x32xf32>
    %78 = arith.subf %65, %77 : vector<16x32xf32>
    %cst_23 = arith.constant 9.99999974E-6 : f32
    %79 = vector.broadcast %cst_23 : f32 to vector<16x1xf32>
    %80 = arith.addf %76, %79 : vector<16x1xf32>
    %81 = math.rsqrt %80 : vector<16x1xf32>
    %82 = vector.broadcast %81 : vector<16x1xf32> to vector<16x32xf32>
    %83 = arith.mulf %78, %82 : vector<16x32xf32>
    %84 = vector.broadcast %9 : vector<1x32xf32> to vector<16x32xf32>
    %85 = arith.mulf %83, %84 : vector<16x32xf32>
    %86 = vector.broadcast %10 : vector<1x32xf32> to vector<16x32xf32>
    %87 = arith.addf %85, %86 : vector<16x32xf32>
    %88 = arith.truncf %87 : vector<16x32xf32> to vector<16x32xbf16>
    %c0_24 = arith.constant 0 : index
    %c0_25 = arith.constant 0 : index
    %89 = vector.load %arg4[%c0_24, %c0_25] : memref<32x2048xbf16, #tpu.memory_space<vmem>>, vector<32x2048xbf16>
    %cst_26 = arith.constant dense<0.000000e+00> : vector<16x2048xf32>
    %90 = tpu.matmul %88, %89, %cst_26 {dimension_numbers = #tpu.dot_dimension_numbers<[1], [0], [0], [1], [0, 0, 1, 1], [], []>} : vector<16x32xbf16>, vector<32x2048xbf16>, vector<16x2048xf32> -> vector<16x2048xf32>
    %c0_27 = arith.constant 0 : index
    %c0_28 = arith.constant 0 : index
    %91 = vector.load %arg3[%c0_27, %c0_28] : memref<1x2048xf32, #tpu.memory_space<vmem>>, vector<1x2048xf32>
    %92 = vector.broadcast %91 : vector<1x2048xf32> to vector<16x2048xf32>
    %93 = arith.addf %90, %92 : vector<16x2048xf32>
    %cst_29 = arith.constant 0.000000e+00 : f32
    %94 = vector.broadcast %cst_29 : f32 to vector<16x2048xf32>
    %95 = arith.maximumf %93, %94 : vector<16x2048xf32>
    %96 = arith.truncf %95 : vector<16x2048xf32> to vector<16x2048xbf16>
    %c0_30 = arith.constant 0 : index
    %c0_31 = arith.constant 0 : index
    %97 = vector.load %arg5[%c0_30, %c0_31] : memref<2048x32xbf16, #tpu.memory_space<vmem>>, vector<2048x32xbf16>
    %cst_32 = arith.constant dense<0.000000e+00> : vector<16x32xf32>
    %98 = tpu.matmul %96, %97, %cst_32 {dimension_numbers = #tpu.dot_dimension_numbers<[1], [0], [0], [1], [0, 0, 1, 1], [], []>} : vector<16x2048xbf16>, vector<2048x32xbf16>, vector<16x32xf32> -> vector<16x32xf32>
    %99 = vector.broadcast %11 : vector<1x32xf32> to vector<16x32xf32>
    %100 = arith.addf %98, %99 : vector<16x32xf32>
    %101 = arith.addf %87, %100 : vector<16x32xf32>
    %cst_33 = arith.constant dense<0.000000e+00> : vector<16xf32>
    %102 = vector.multi_reduction <add>, %101, %cst_33 [1] : vector<16x32xf32> to vector<16xf32>
    %103 = vector.shape_cast %102 : vector<16xf32> to vector<16x1xf32>
    %cst_34 = arith.constant 3.200000e+01 : f32
    %104 = vector.broadcast %cst_34 : f32 to vector<16x1xf32>
    %105 = arith.divf %103, %104 : vector<16x1xf32>
    %106 = vector.broadcast %105 : vector<16x1xf32> to vector<16x32xf32>
    %107 = arith.subf %101, %106 : vector<16x32xf32>
    %108 = arith.mulf %107, %107 : vector<16x32xf32>
    %cst_35 = arith.constant dense<0.000000e+00> : vector<16xf32>
    %109 = vector.multi_reduction <add>, %108, %cst_35 [1] : vector<16x32xf32> to vector<16xf32>
    %110 = vector.shape_cast %109 : vector<16xf32> to vector<16x1xf32>
    %cst_36 = arith.constant 3.200000e+01 : f32
    %111 = vector.broadcast %cst_36 : f32 to vector<16x1xf32>
    %112 = arith.divf %110, %111 : vector<16x1xf32>
    %113 = vector.broadcast %105 : vector<16x1xf32> to vector<16x32xf32>
    %114 = arith.subf %101, %113 : vector<16x32xf32>
    %cst_37 = arith.constant 9.99999974E-6 : f32
    %115 = vector.broadcast %cst_37 : f32 to vector<16x1xf32>
    %116 = arith.addf %112, %115 : vector<16x1xf32>
    %117 = math.rsqrt %116 : vector<16x1xf32>
    %118 = vector.broadcast %117 : vector<16x1xf32> to vector<16x32xf32>
    %119 = arith.mulf %114, %118 : vector<16x32xf32>
    %cst_38 = arith.constant dense<0.000000e+00> : vector<16x128xf32>
    %120 = tpu.matmul %119, %5, %cst_38 {dimension_numbers = #tpu.dot_dimension_numbers<[1], [0], [0], [1], [0, 0, 1, 1], [], []>} : vector<16x32xf32>, vector<32x128xf32>, vector<16x128xf32> -> vector<16x128xf32>
    %121 = vector.broadcast %12 : vector<1x128xf32> to vector<16x128xf32>
    %122 = arith.addf %120, %121 : vector<16x128xf32>
    %c0_39 = arith.constant 0 : index
    %c0_40 = arith.constant 0 : index
    %123 = vector.load %arg6[%c0_39, %c0_40] : memref<16x128xf32, #tpu.memory_space<vmem>>, vector<16x128xf32>
    tpu.vector_store %arg6[%c0_39, %c0_40], %122 {strides = array<i32>} : memref<16x128xf32, #tpu.memory_space<vmem>>, vector<16x128xf32>,
    return
  }
}

</mosaic_0001>

<llo_original>
// kernel: minimal_transformer.1
$region0: #{minimal_transformer.1}
  #allocation0 [shape = 'u32[]', space=smem, size = 0x4, offset = 0x4, fixed_abs, tag = 'smem constant byte address 0x4 - core index']
  #allocation1 [shape = 'u32[144,128]{1,0:T(1,128)}', space=vmem, size = 0x12000, scoped, tag = 'internal scratch']
  %s0 = inlined_call_operand.vmem [shape: s32[16,1], index: 0, kind: input, shape index: {}]
  %s1 = inlined_call_operand.vmem [shape: f32[72,32], index: 1, kind: input, shape index: {}]
  %s2 = inlined_call_operand.vmem [shape: f32[136,128], index: 2, kind: input, shape index: {}]
  %s3 = inlined_call_operand.vmem [shape: f32[1,2048], index: 3, kind: input, shape index: {}]
  %s4 = inlined_call_operand.vmem [shape: bf16[32,2048], index: 4, kind: input, shape index: {}]
  %s5 = inlined_call_operand.vmem [shape: bf16[2048,32], index: 5, kind: input, shape index: {}]
  %s6 = inlined_call_operand.vmem [shape: f32[16,128], index: 6, kind: output, shape index: {}]
  %s7 = sld [smem:[#allocation0]]
  $region34: #{minimal_transformer.1} parent=0
    _
  %s9 = ssub.s32 1, %s7
  %s10 = scalar_select 0, %s9, %s7
  // Predicated region
  $region2: #{minimal_transformer.1} parent=0 // pred_check
    _
  $region3: #{minimal_transformer.1} parent=0 // pred_check_branch
    %12 = sbr.rel (0) target = $region5
  $region4: #{minimal_transformer.1} parent=0 // pred_region
    _
  $region5: #{minimal_transformer.1} parent=0 // pred_fallthru
    _
  // Predicated region
  $region6: #{minimal_transformer.1} parent=0 // pred_check
    _
  $region7: #{minimal_transformer.1} parent=0 // pred_check_branch
    %14 = sbr.rel (0) target = $region9
  $region8: #{minimal_transformer.1} parent=0 // pred_region
    _
  $region9: #{minimal_transformer.1} parent=0 // pred_fallthru
    _
  // Predicated region
  $region10: #{minimal_transformer.1} parent=0 // pred_check
    _
  $region11: #{minimal_transformer.1} parent=0 // pred_check_branch
    %16 = sbr.rel (0) target = $region13
  $region12: #{minimal_transformer.1} parent=0 // pred_region
    _
  $region13: #{minimal_transformer.1} parent=0 // pred_fallthru
    _
  // Predicated region
  $region14: #{minimal_transformer.1} parent=0 // pred_check
    _
  $region15: #{minimal_transformer.1} parent=0 // pred_check_branch
    %18 = sbr.rel (0) target = $region17
  $region16: #{minimal_transformer.1} parent=0 // pred_region
    _
  $region17: #{minimal_transformer.1} parent=0 // pred_fallthru
    _
  // Predicated region
  $region18: #{minimal_transformer.1} parent=0 // pred_check
    _
  $region19: #{minimal_transformer.1} parent=0 // pred_check_branch
    %20 = sbr.rel (0) target = $region21
  $region20: #{minimal_transformer.1} parent=0 // pred_region
    _
  $region21: #{minimal_transformer.1} parent=0 // pred_fallthru
    _
  // Predicated region
  $region22: #{minimal_transformer.1} parent=0 // pred_check
    _
  $region23: #{minimal_transformer.1} parent=0 // pred_check_branch
    %22 = sbr.rel (0) target = $region25
  $region24: #{minimal_transformer.1} parent=0 // pred_region
    _
  $region25: #{minimal_transformer.1} parent=0 // pred_fallthru
    _
  %v24 = vld [vmem:[%s2] sm:$0xff]
  %v25 = vld [vmem:[%s2 + $0x8] sm:$0xff]
  %v26 = vld [vmem:[%s2 + $0x10] sm:$0xff]
  %v27 = vld [vmem:[%s2 + $0x18] sm:$0xff]
  %v28 = vld [vmem:[%s2 + $0x20] sm:$0xff]
  %v29 = vld [vmem:[%s2 + $0x28] sm:$0xff]
  %v30 = vld [vmem:[%s2 + $0x30] sm:$0xff]
  %v31 = vld [vmem:[%s2 + $0x38] sm:$0xff]
  %v32 = vld [vmem:[%s2 + $0x40] sm:$0xff]
  %v33 = vld [vmem:[%s2 + $0x48] sm:$0xff]
  %v34 = vld [vmem:[%s2 + $0x50] sm:$0xff]
  %v35 = vld [vmem:[%s2 + $0x58] sm:$0xff]
  %v36 = vld [vmem:[%s2 + $0x60] sm:$0xff]
  %v37 = vld [vmem:[%s2 + $0x68] sm:$0xff]
  %v38 = vld [vmem:[%s2 + $0x70] sm:$0xff]
  %v39 = vld [vmem:[%s2 + $0x78] sm:$0xff]
  %v40 = vld [vmem:[%s2 + $0x80] sm:$0xff]
  %v41 = vld [vmem:[%s0] sm:$0xff]
  %v42 = vld [vmem:[%s0 + $0x8] sm:$0xff]
  %v43 = vlaneseq
  %v44 = vand.u32 %v43, 127
  %v45 = vlaneseq
  %v46 = vshrl.u32 %v45, 7
  %v47 = vadd.s32 %v46, 8
  %vm48 = vcmp.lt.s32.totalorder %v46, 0
  %v49 = vsub.s32 0, %v46
  %v50 = vsel %vm48, %v49, %v46
  %v51 = vshrl.u32 %v50, 3
  %v52 = vand.u32 %v50, 7
  %v53 = vsub.s32 0, %v52
  %v54 = vsel %vm48, %v53, %v52
  %vm55 = vcmp.lt.s32.totalorder %v47, 0
  %v56 = vsub.s32 0, %v47
  %v57 = vsel %vm55, %v56, %v47
  %v58 = vshrl.u32 %v57, 3
  %v59 = vand.u32 %v57, 7
  %v60 = vsub.s32 0, %v59
  %v61 = vsel %vm55, %v60, %v59
  %vm62 = vcmp.ne.s32.totalorder %v54, 0
  %vm63 = vcmp.ne.s32.totalorder %v61, 0
  %vm64 = vcmp.lt.s32.totalorder %v54, 0
  %vm65 = vcmp.lt.s32.totalorder %v61, 0
  %vm66 = vmand %vm64, %vm62
  %vm67 = vmand %vm65, %vm63
  %v68 = vadd.s32 %v54, 8
  %v69 = vadd.s32 %v61, 8
  %v70 = vsel %vm66, %v68, %v54
  %v71 = vsel %vm67, %v69, %v61
  %72 = vset.pattern.permute.xlu0 0
  %73 = vperm.xlu0 %72, %v41
  %v74 = vpop.permute.xlu0 %73
  %75 = vset.pattern.permute.xlu0 0
  %76 = vperm.xlu0 %75, %v42
  %v77 = vpop.permute.xlu0 %76
  %vm78 = vcmp.eq.s32.totalorder %v44, %v74
  %vm79 = vcmp.eq.s32.totalorder %v44, %v77
  %v80 = vadd.s32 %v70, 64
  %v81 = vadd.s32 %v71, 64
  %vm82 = vcmp.eq.s32.totalorder %v44, %v80
  %vm83 = vcmp.eq.s32.totalorder %v44, %v81
  %vm84 = vmor %vm78, %vm82
  %vm85 = vmor %vm79, %vm83
  %v86 = vsel %vm84, 1, 0
  %v87 = vsel %vm85, 1, 0
  %v88 = vcvt.s32.f32 %v86
  %v89 = vcvt.s32.f32 %v87
  %v90 = vld [vmem:[%s1] sm:$0xff]
  %v91 = vld [vmem:[%s1 + $0x8] sm:$0xff]
  %v92 = vld [vmem:[%s1 + $0x10] sm:$0xff]
  %v93 = vld [vmem:[%s1 + $0x18] sm:$0xff]
  %v94 = vld [vmem:[%s1 + $0x20] sm:$0xff]
  %v95 = vld [vmem:[%s1 + $0x28] sm:$0xff]
  %v96 = vld [vmem:[%s1 + $0x30] sm:$0xff]
  %v97 = vld [vmem:[%s1 + $0x38] sm:$0xff]
  %v98 = vld [vmem:[%s1 + $0x40] sm:$0xff]
  %vm99 = vcmask 588800
  %v101 = vsel %vm99, %v88, 0
  %v104 = vsel %vm99, %v89, 0
  %106 = vmatprep.subr.mxu0 0.0
  %107 = vmatpush1.msra.mxu0 %v90
  %108 = vmatprep.subr.mxu0 0.0
  %109 = vmatpush1.msra.mxu0 %v91
  %110 = vmatprep.subr.mxu0 0.0
  %111 = vmatpush1.msra.mxu0 %v92
  %112 = vmatprep.subr.mxu0 0.0
  %113 = vmatpush1.msra.mxu0 %v93
  %114 = vmatprep.subr.mxu0 0.0
  %115 = vmatpush1.msra.mxu0 %v94
  %116 = vmatprep.subr.mxu0 0.0
  %117 = vmatpush1.msra.mxu0 %v95
  %118 = vmatprep.subr.mxu0 0.0
  %119 = vmatpush1.msra.mxu0 %v96
  %120 = vmatprep.subr.mxu0 0.0
  %121 = vmatpush1.msra.mxu0 %v97
  %122 = vmatprep.subr.mxu0 0.0
  %123 = vmatpush1.msra.mxu0 %v98
  %124 = vmatprep.subr.mxu0 0.0
  %125 = vmatpush1.msra.mxu0 0.0
  %126 = vmatprep.subr.mxu0 0.0
  %127 = vmatpush1.msra.mxu0 0.0
  %128 = vmatprep.subr.mxu0 0.0
  %129 = vmatpush1.msra.mxu0 0.0
  %130 = vmatprep.subr.mxu0 0.0
  %131 = vmatpush1.msra.mxu0 0.0
  %132 = vmatprep.subr.mxu0 0.0
  %133 = vmatpush1.msra.mxu0 0.0
  %134 = vmatprep.subr.mxu0 0.0
  %135 = vmatpush1.msra.mxu0 0.0
  %136 = vmatprep.subr.mxu0 0.0
  %137 = vmatpush1.msra.mxu0 0.0
  %138 = vmatprep.subr.mxu0 0.0
  %139 = vmatpush1.msra.mxu0 0.0
  %140 = vmatprep.subr.mxu0 0.0
  %141 = vmatpush1.msra.mxu0 0.0
  %142 = vmatprep.subr.mxu0 0.0
  %143 = vmatpush1.msra.mxu0 0.0
  %144 = vmatprep.subr.mxu0 0.0
  %145 = vmatpush1.msra.mxu0 0.0
  %146 = vmatprep.subr.mxu0 0.0
  %147 = vmatpush1.msra.mxu0 0.0
  %148 = vmatprep.subr.mxu0 0.0
  %149 = vmatpush1.msra.mxu0 0.0
  %150 = vmatprep.subr.mxu0 0.0
  %151 = vmatpush1.msra.mxu0 0.0
  %152 = vmatprep.subr.mxu0 0.0
  %153 = vmatpush1.msra.mxu0 0.0
  %154 = vmatprep.subr.mxu0 0.0
  %155 = vmatpush1.msra.mxu0 0.0
  %156 = vmatprep.subr.mxu0 0.0
  %157 = vmatpush1.msra.mxu0 0.0
  %158 = vmatprep.subr.mxu0 0.0
  %159 = vmatpush1.msra.mxu0 0.0
  %160 = vmatprep.subr.mxu0 0.0
  %161 = vmatpush1.msra.mxu0 0.0
  %162 = vmatprep.subr.mxu0 0.0
  %163 = vmatpush1.msra.mxu0 0.0
  %164 = vmatprep.subr.mxu0 0.0
  %165 = vmatpush1.msra.mxu0 0.0
  %166 = vmatprep.subr.mxu0 0.0
  %167 = vmatpush1.msra.mxu0 0.0
  %168 = vmatprep.subr.mxu0 0.0
  %169 = vmatpush1.msra.mxu0 0.0
  %170 = vmatprep.mubr.f32.mxu0 0.0
  %171 = vmatmul.mubr.f32.gmra.mrb[0].mxu0 %v101
  %v172 = vpop.f32.mrb[0].mxu0
  %v173 = vadd.f32 0.0, %v172
  %v174 = vpop.f32.mrb[0].mxu0
  %175 = vmatprep.mubr.f32.mxu0 0.0
  %176 = vmatmul.mubr.f32.gmra.mrb[0].mxu0 %v104
  %v177 = vpop.f32.mrb[0].mxu0
  %v178 = vadd.f32 0.0, %v177
  %v179 = vpop.f32.mrb[0].mxu0
  %180 = vdwg.mxu0
  %v181 = vlaneseq
  %v182 = vshrl.u32 %v181, 7
  %v183 = vsub.s32 0, %v182
  %v184 = vrot.slane %v40, %v183
  %vm185 = vcmask 261120
  %v187 = vsel %vm185, %v173, 0
  %v190 = vsel %vm185, %v178, 0
  %192 = vmatprep.subr.mxu0 0.0
  %193 = vmatpush1.msra.mxu0 %v24
  %194 = vmatprep.subr.mxu0 0.0
  %195 = vmatpush1.msra.mxu0 %v25
  %196 = vmatprep.subr.mxu0 0.0
  %197 = vmatpush1.msra.mxu0 %v26
  %198 = vmatprep.subr.mxu0 0.0
  %199 = vmatpush1.msra.mxu0 %v27
  %200 = vmatprep.subr.mxu0 0.0
  %201 = vmatpush1.msra.mxu0 0.0
  %202 = vmatprep.subr.mxu0 0.0
  %203 = vmatpush1.msra.mxu0 0.0
  %204 = vmatprep.subr.mxu0 0.0
  %205 = vmatpush1.msra.mxu0 0.0
  %206 = vmatprep.subr.mxu0 0.0
  %207 = vmatpush1.msra.mxu0 0.0
  %208 = vmatprep.subr.mxu0 0.0
  %209 = vmatpush1.msra.mxu0 0.0
  %210 = vmatprep.subr.mxu0 0.0
  %211 = vmatpush1.msra.mxu0 0.0
  %212 = vmatprep.subr.mxu0 0.0
  %213 = vmatpush1.msra.mxu0 0.0
  %214 = vmatprep.subr.mxu0 0.0
  %215 = vmatpush1.msra.mxu0 0.0
  %216 = vmatprep.subr.mxu0 0.0
  %217 = vmatpush1.msra.mxu0 0.0
  %218 = vmatprep.subr.mxu0 0.0
  %219 = vmatpush1.msra.mxu0 0.0
  %220 = vmatprep.subr.mxu0 0.0
  %221 = vmatpush1.msra.mxu0 0.0
  %222 = vmatprep.subr.mxu0 0.0
  %223 = vmatpush1.msra.mxu0 0.0
  %224 = vmatprep.subr.mxu0 0.0
  %225 = vmatpush1.msra.mxu0 0.0
  %226 = vmatprep.subr.mxu0 0.0
  %227 = vmatpush1.msra.mxu0 0.0
  %228 = vmatprep.subr.mxu0 0.0
  %229 = vmatpush1.msra.mxu0 0.0
  %230 = vmatprep.subr.mxu0 0.0
  %231 = vmatpush1.msra.mxu0 0.0
  %232 = vmatprep.subr.mxu0 0.0
  %233 = vmatpush1.msra.mxu0 0.0
  %234 = vmatprep.subr.mxu0 0.0
  %235 = vmatpush1.msra.mxu0 0.0
  %236 = vmatprep.subr.mxu0 0.0
  %237 = vmatpush1.msra.mxu0 0.0
  %238 = vmatprep.subr.mxu0 0.0
  %239 = vmatpush1.msra.mxu0 0.0
  %240 = vmatprep.subr.mxu0 0.0
  %241 = vmatpush1.msra.mxu0 0.0
  %242 = vmatprep.subr.mxu0 0.0
  %243 = vmatpush1.msra.mxu0 0.0
  %244 = vmatprep.subr.mxu0 0.0
  %245 = vmatpush1.msra.mxu0 0.0
  %246 = vmatprep.subr.mxu0 0.0
  %247 = vmatpush1.msra.mxu0 0.0
  %248 = vmatprep.subr.mxu0 0.0
  %249 = vmatpush1.msra.mxu0 0.0
  %250 = vmatprep.subr.mxu0 0.0
  %251 = vmatpush1.msra.mxu0 0.0
  %252 = vmatprep.subr.mxu0 0.0
  %253 = vmatpush1.msra.mxu0 0.0
  %254 = vmatprep.subr.mxu0 0.0
  %255 = vmatpush1.msra.mxu0 0.0
  %256 = vmatprep.mubr.f32.mxu0 0.0
  %257 = vmatmul.mubr.f32.gmra.mrb[0].mxu0 %v187
  %v258 = vpop.f32.mrb[0].mxu0
  %v259 = vadd.f32 %v184, %v258
  %v260 = vpop.f32.mrb[0].mxu0
  %261 = vmatprep.mubr.f32.mxu0 0.0
  %262 = vmatmul.mubr.f32.gmra.mrb[0].mxu0 %v190
  %v263 = vpop.f32.mrb[0].mxu0
  %v264 = vadd.f32 %v184, %v263
  %v265 = vpop.f32.mrb[0].mxu0
  %266 = vdwg.mxu0
  %269 = vrot.lane.b32.xlu0 %v259, 96
  %v270 = vpop.permute.xlu0 %269
  %271 = vrot.lane.b32.xlu0 %v264, 96
  %v272 = vpop.permute.xlu0 %271
  %273 = vrot.lane.b32.xlu0 %v259, 64
  %v274 = vpop.permute.xlu0 %273
  %275 = vrot.lane.b32.xlu0 %v264, 64
  %v276 = vpop.permute.xlu0 %275
  %279 = vrot.lane.b32.xlu0 %v272, 32
  %v280 = vpop.permute.xlu0 %279
  %281 = vrot.lane.b32.xlu0 %v270, 32
  %v282 = vpop.permute.xlu0 %281
  %v285 = vsub.f32 %v259, %v280
  %v286 = vsub.f32 %v264, %v282
  %289 = vrot.lane.b32.xlu0 %v285, 96
  %v290 = vpop.permute.xlu0 %289
  %291 = vrot.lane.b32.xlu0 %v286, 96
  %v292 = vpop.permute.xlu0 %291
  %v295 = vmul.f32 %v259, %v290
  %v296 = vmul.f32 %v264, %v292
  %v298 = vsel %vm185, %v295, 0
  %v301 = vsel %vm185, %v296, 0
  %303 = vmatprep.subr.mxu0 0.0
  %304 = vmatpush1.msra.mxu0 %v32
  %305 = vmatprep.subr.mxu0 0.0
  %306 = vmatpush1.msra.mxu0 %v33
  %307 = vmatprep.subr.mxu0 0.0
  %308 = vmatpush1.msra.mxu0 %v34
  %309 = vmatprep.subr.mxu0 0.0
  %310 = vmatpush1.msra.mxu0 %v35
  %311 = vmatprep.subr.mxu0 0.0
  %312 = vmatpush1.msra.mxu0 0.0
  %313 = vmatprep.subr.mxu0 0.0
  %314 = vmatpush1.msra.mxu0 0.0
  %315 = vmatprep.subr.mxu0 0.0
  %316 = vmatpush1.msra.mxu0 0.0
  %317 = vmatprep.subr.mxu0 0.0
  %318 = vmatpush1.msra.mxu0 0.0
  %319 = vmatprep.subr.mxu0 0.0
  %320 = vmatpush1.msra.mxu0 0.0
  %321 = vmatprep.subr.mxu0 0.0
  %322 = vmatpush1.msra.mxu0 0.0
  %323 = vmatprep.subr.mxu0 0.0
  %324 = vmatpush1.msra.mxu0 0.0
  %325 = vmatprep.subr.mxu0 0.0
  %326 = vmatpush1.msra.mxu0 0.0
  %327 = vmatprep.subr.mxu0 0.0
  %328 = vmatpush1.msra.mxu0 0.0
  %329 = vmatprep.subr.mxu0 0.0
  %330 = vmatpush1.msra.mxu0 0.0
  %331 = vmatprep.subr.mxu0 0.0
  %332 = vmatpush1.msra.mxu0 0.0
  %333 = vmatprep.subr.mxu0 0.0
  %334 = vmatpush1.msra.mxu0 0.0
  %335 = vmatprep.subr.mxu0 0.0
  %336 = vmatpush1.msra.mxu0 0.0
  %337 = vmatprep.subr.mxu0 0.0
  %338 = vmatpush1.msra.mxu0 0.0
  %339 = vmatprep.subr.mxu0 0.0
  %340 = vmatpush1.msra.mxu0 0.0
  %341 = vmatprep.subr.mxu0 0.0
  %342 = vmatpush1.msra.mxu0 0.0
  %343 = vmatprep.subr.mxu0 0.0
  %344 = vmatpush1.msra.mxu0 0.0
  %345 = vmatprep.subr.mxu0 0.0
  %346 = vmatpush1.msra.mxu0 0.0
  %347 = vmatprep.subr.mxu0 0.0
  %348 = vmatpush1.msra.mxu0 0.0
  %349 = vmatprep.subr.mxu0 0.0
  %350 = vmatpush1.msra.mxu0 0.0
  %351 = vmatprep.subr.mxu0 0.0
  %352 = vmatpush1.msra.mxu0 0.0
  %353 = vmatprep.subr.mxu0 0.0
  %354 = vmatpush1.msra.mxu0 0.0
  %355 = vmatprep.subr.mxu0 0.0
  %356 = vmatpush1.msra.mxu0 0.0
  %357 = vmatprep.subr.mxu0 0.0
  %358 = vmatpush1.msra.mxu0 0.0
  %359 = vmatprep.subr.mxu0 0.0
  %360 = vmatpush1.msra.mxu0 0.0
  %361 = vmatprep.subr.mxu0 0.0
  %362 = vmatpush1.msra.mxu0 0.0
  %363 = vmatprep.subr.mxu0 0.0
  %364 = vmatpush1.msra.mxu0 0.0
  %365 = vmatprep.subr.mxu0 0.0
  %366 = vmatpush1.msra.mxu0 0.0
  %367 = vmatprep.mubr.f32.mxu0 0.0
  %368 = vmatmul.mubr.f32.gmra.mrb[0].mxu0 %v298
  %v369 = vpop.f32.mrb[0].mxu0
  %v370 = vadd.f32 0.0, %v369
  %v371 = vpop.f32.mrb[0].mxu0
  %372 = vmatprep.mubr.f32.mxu0 0.0
  %373 = vmatmul.mubr.f32.gmra.mrb[0].mxu0 %v301
  %v374 = vpop.f32.mrb[0].mxu0
  %v375 = vadd.f32 0.0, %v374
  %v376 = vpop.f32.mrb[0].mxu0
  %377 = vdwg.mxu0
  %v378 = vsub.f32 0.0, %v370
  %v379 = vsub.f32 0.0, %v375
  %v380 = vmul.f32 %v378, 1.442695
  %v381 = vpow.pop %v380
  %v382 = vmul.f32 %v379, 1.442695
  %v383 = vpow.pop %v382
  %v384 = vadd.f32 %v381, 1.0
  %v385 = vadd.f32 %v383, 1.0
  %v386 = vrcp.pop %v384
  %v387 = vrcp.pop %v385
  %388 = vrot.lane.b32.xlu0 %v276, 64
  %v389 = vpop.permute.xlu0 %388
  %390 = vrot.lane.b32.xlu0 %v274, 64
  %v391 = vpop.permute.xlu0 %390
  %v394 = vsub.f32 %v259, %v389
  %v395 = vsub.f32 %v264, %v391
  %398 = vrot.lane.b32.xlu0 %v394, 64
  %v399 = vpop.permute.xlu0 %398
  %400 = vrot.lane.b32.xlu0 %v395, 64
  %v401 = vpop.permute.xlu0 %400
  %v404 = vmul.f32 %v386, %v399
  %v405 = vmul.f32 %v387, %v401
  %v406 = vadd.f32 %v276, %v404
  %v407 = vadd.f32 %v274, %v405
  %v408 = vlaneseq
  %v409 = vshrl.u32 %v408, 7
  %v410 = vsub.s32 1, %v409
  %v411 = vrot.slane %v40, %v410
  %v413 = vsel %vm185, %v406, 0
  %v416 = vsel %vm185, %v407, 0
  %418 = vmatprep.subr.mxu0 0.0
  %419 = vmatpush1.msra.mxu0 %v28
  %420 = vmatprep.subr.mxu0 0.0
  %421 = vmatpush1.msra.mxu0 %v29
  %422 = vmatprep.subr.mxu0 0.0
  %423 = vmatpush1.msra.mxu0 %v30
  %424 = vmatprep.subr.mxu0 0.0
  %425 = vmatpush1.msra.mxu0 %v31
  %426 = vmatprep.subr.mxu0 0.0
  %427 = vmatpush1.msra.mxu0 0.0
  %428 = vmatprep.subr.mxu0 0.0
  %429 = vmatpush1.msra.mxu0 0.0
  %430 = vmatprep.subr.mxu0 0.0
  %431 = vmatpush1.msra.mxu0 0.0
  %432 = vmatprep.subr.mxu0 0.0
  %433 = vmatpush1.msra.mxu0 0.0
  %434 = vmatprep.subr.mxu0 0.0
  %435 = vmatpush1.msra.mxu0 0.0
  %436 = vmatprep.subr.mxu0 0.0
  %437 = vmatpush1.msra.mxu0 0.0
  %438 = vmatprep.subr.mxu0 0.0
  %439 = vmatpush1.msra.mxu0 0.0
  %440 = vmatprep.subr.mxu0 0.0
  %441 = vmatpush1.msra.mxu0 0.0
  %442 = vmatprep.subr.mxu0 0.0
  %443 = vmatpush1.msra.mxu0 0.0
  %444 = vmatprep.subr.mxu0 0.0
  %445 = vmatpush1.msra.mxu0 0.0
  %446 = vmatprep.subr.mxu0 0.0
  %447 = vmatpush1.msra.mxu0 0.0
  %448 = vmatprep.subr.mxu0 0.0
  %449 = vmatpush1.msra.mxu0 0.0
  %450 = vmatprep.subr.mxu0 0.0
  %451 = vmatpush1.msra.mxu0 0.0
  %452 = vmatprep.subr.mxu0 0.0
  %453 = vmatpush1.msra.mxu0 0.0
  %454 = vmatprep.subr.mxu0 0.0
  %455 = vmatpush1.msra.mxu0 0.0
  %456 = vmatprep.subr.mxu0 0.0
  %457 = vmatpush1.msra.mxu0 0.0
  %458 = vmatprep.subr.mxu0 0.0
  %459 = vmatpush1.msra.mxu0 0.0
  %460 = vmatprep.subr.mxu0 0.0
  %461 = vmatpush1.msra.mxu0 0.0
  %462 = vmatprep.subr.mxu0 0.0
  %463 = vmatpush1.msra.mxu0 0.0
  %464 = vmatprep.subr.mxu0 0.0
  %465 = vmatpush1.msra.mxu0 0.0
  %466 = vmatprep.subr.mxu0 0.0
  %467 = vmatpush1.msra.mxu0 0.0
  %468 = vmatprep.subr.mxu0 0.0
  %469 = vmatpush1.msra.mxu0 0.0
  %470 = vmatprep.subr.mxu0 0.0
  %471 = vmatpush1.msra.mxu0 0.0
  %472 = vmatprep.subr.mxu0 0.0
  %473 = vmatpush1.msra.mxu0 0.0
  %474 = vmatprep.subr.mxu0 0.0
  %475 = vmatpush1.msra.mxu0 0.0
  %476 = vmatprep.subr.mxu0 0.0
  %477 = vmatpush1.msra.mxu0 0.0
  %478 = vmatprep.subr.mxu0 0.0
  %479 = vmatpush1.msra.mxu0 0.0
  %480 = vmatprep.subr.mxu0 0.0
  %481 = vmatpush1.msra.mxu0 0.0
  %482 = vmatprep.mubr.f32.mxu0 0.0
  %483 = vmatmul.mubr.f32.gmra.mrb[0].mxu0 %v413
  %v484 = vpop.f32.mrb[0].mxu0
  %v485 = vadd.f32 %v411, %v484
  %v486 = vpop.f32.mrb[0].mxu0
  %487 = vmatprep.mubr.f32.mxu0 0.0
  %488 = vmatmul.mubr.f32.gmra.mrb[0].mxu0 %v416
  %v489 = vpop.f32.mrb[0].mxu0
  %v490 = vadd.f32 %v411, %v489
  %v491 = vpop.f32.mrb[0].mxu0
  %492 = vdwg.mxu0
  %v493 = vadd.f32 %v173, %v485
  %v494 = vadd.f32 %v178, %v490
  %v495 = vsel %vm185, %v493, 0.0
  %496 = vadd.xlane.f32.xlu0 %v495
  %v497 = vpop.xlane.xlu0 %496
  %v498 = vsel %vm185, %v494, 0.0
  %499 = vadd.xlane.f32.xlu0 %v498
  %v500 = vpop.xlane.xlu0 %499
  %v501 = vrcp.pop 32.0
  %v502 = vmul.f32 %v497, %v501
  %v503 = vmul.f32 %v500, %v501
  %v504 = vsub.f32 %v493, %v502
  %v505 = vsub.f32 %v494, %v503
  %v506 = vmul.f32 %v504, %v504
  %v507 = vmul.f32 %v505, %v505
  %v508 = vsel %vm185, %v506, 0.0
  %509 = vadd.xlane.f32.xlu0 %v508
  %v510 = vpop.xlane.xlu0 %509
  %v511 = vsel %vm185, %v507, 0.0
  %512 = vadd.xlane.f32.xlu0 %v511
  %v513 = vpop.xlane.xlu0 %512
  %v514 = vmul.f32 %v510, %v501
  %v515 = vmul.f32 %v513, %v501
  %v516 = vadd.f32 %v514, 1e-05
  %v517 = vadd.f32 %v515, 1e-05
  %v518 = vrsqrt.pop %v516
  %v519 = vrsqrt.pop %v517
  %v520 = vmul.f32 %v504, %v518
  %v521 = vmul.f32 %v505, %v519
  %v522 = vlaneseq
  %v523 = vshrl.u32 %v522, 7
  %v524 = vsub.s32 2, %v523
  %v525 = vrot.slane %v40, %v524
  %v526 = vmul.f32 %v520, %v525
  %v527 = vmul.f32 %v521, %v525
  %v528 = vlaneseq
  %v529 = vshrl.u32 %v528, 7
  %v530 = vsub.s32 3, %v529
  %v531 = vrot.slane %v40, %v530
  %v532 = vadd.f32 %v526, %v531
  %v533 = vadd.f32 %v527, %v531
  %v534 = vpack.c.bf16 %v533, %v532
  %v535 = vld [vmem:[%s4] sm:$0xff]
  %v536 = vld [vmem:[%s4 + $0x8] sm:$0xff]
  %v537 = vld [vmem:[%s4 + $0x10] sm:$0xff]
  %v538 = vld [vmem:[%s4 + $0x18] sm:$0xff]
  %v539 = vld [vmem:[%s4 + $0x20] sm:$0xff]
  %v540 = vld [vmem:[%s4 + $0x28] sm:$0xff]
  %v541 = vld [vmem:[%s4 + $0x30] sm:$0xff]
  %v542 = vld [vmem:[%s4 + $0x38] sm:$0xff]
  %v543 = vld [vmem:[%s4 + $0x40] sm:$0xff]
  %v544 = vld [vmem:[%s4 + $0x48] sm:$0xff]
  %v545 = vld [vmem:[%s4 + $0x50] sm:$0xff]
  %v546 = vld [vmem:[%s4 + $0x58] sm:$0xff]
  %v547 = vld [vmem:[%s4 + $0x60] sm:$0xff]
  %v548 = vld [vmem:[%s4 + $0x68] sm:$0xff]
  %v549 = vld [vmem:[%s4 + $0x70] sm:$0xff]
  %v550 = vld [vmem:[%s4 + $0x78] sm:$0xff]
  %v551 = vld [vmem:[%s4 + $0x80] sm:$0xff]
  %v552 = vld [vmem:[%s4 + $0x88] sm:$0xff]
  %v553 = vld [vmem:[%s4 + $0x90] sm:$0xff]
  %v554 = vld [vmem:[%s4 + $0x98] sm:$0xff]
  %v555 = vld [vmem:[%s4 + $0xa0] sm:$0xff]
  %v556 = vld [vmem:[%s4 + $0xa8] sm:$0xff]
  %v557 = vld [vmem:[%s4 + $0xb0] sm:$0xff]
  %v558 = vld [vmem:[%s4 + $0xb8] sm:$0xff]
  %v559 = vld [vmem:[%s4 + $0xc0] sm:$0xff]
  %v560 = vld [vmem:[%s4 + $0xc8] sm:$0xff]
  %v561 = vld [vmem:[%s4 + $0xd0] sm:$0xff]
  %v562 = vld [vmem:[%s4 + $0xd8] sm:$0xff]
  %v563 = vld [vmem:[%s4 + $0xe0] sm:$0xff]
  %v564 = vld [vmem:[%s4 + $0xe8] sm:$0xff]
  %v565 = vld [vmem:[%s4 + $0xf0] sm:$0xff]
  %v566 = vld [vmem:[%s4 + $0xf8] sm:$0xff]
  %v567 = vld [vmem:[%s3] sm:$0xff]
  %v568 = vld [vmem:[%s3 + $0x8] sm:$0xff]
  %v571 = vlaneseq
  %v572 = vshrl.u32 %v571, 7
  %v573 = vsub.s32 0, %v572
  %v574 = vrot.slane %v567, %v573
  %v575 = vlaneseq
  %v576 = vshrl.u32 %v575, 7
  %v577 = vsub.s32 1, %v576
  %v578 = vrot.slane %v567, %v577
  %v579 = vlaneseq
  %v580 = vshrl.u32 %v579, 7
  %v581 = vsub.s32 2, %v580
  %v582 = vrot.slane %v567, %v581
  %v583 = vlaneseq
  %v584 = vshrl.u32 %v583, 7
  %v585 = vsub.s32 3, %v584
  %v586 = vrot.slane %v567, %v585
  %v587 = vlaneseq
  %v588 = vshrl.u32 %v587, 7
  %v589 = vsub.s32 4, %v588
  %v590 = vrot.slane %v567, %v589
  %v591 = vlaneseq
  %v592 = vshrl.u32 %v591, 7
  %v593 = vsub.s32 5, %v592
  %v594 = vrot.slane %v567, %v593
  %v595 = vlaneseq
  %v596 = vshrl.u32 %v595, 7
  %v597 = vsub.s32 6, %v596
  %v598 = vrot.slane %v567, %v597
  %v599 = vlaneseq
  %v600 = vshrl.u32 %v599, 7
  %v601 = vsub.s32 7, %v600
  %v602 = vrot.slane %v567, %v601
  %v603 = vlaneseq
  %v604 = vshrl.u32 %v603, 7
  %v605 = vsub.s32 0, %v604
  %v606 = vrot.slane %v568, %v605
  %v607 = vlaneseq
  %v608 = vshrl.u32 %v607, 7
  %v609 = vsub.s32 1, %v608
  %v610 = vrot.slane %v568, %v609
  %v611 = vlaneseq
  %v612 = vshrl.u32 %v611, 7
  %v613 = vsub.s32 2, %v612
  %v614 = vrot.slane %v568, %v613
  %v615 = vlaneseq
  %v616 = vshrl.u32 %v615, 7
  %v617 = vsub.s32 3, %v616
  %v618 = vrot.slane %v568, %v617
  %v619 = vlaneseq
  %v620 = vshrl.u32 %v619, 7
  %v621 = vsub.s32 4, %v620
  %v622 = vrot.slane %v568, %v621
  %v623 = vlaneseq
  %v624 = vshrl.u32 %v623, 7
  %v625 = vsub.s32 5, %v624
  %v626 = vrot.slane %v568, %v625
  %v627 = vlaneseq
  %v628 = vshrl.u32 %v627, 7
  %v629 = vsub.s32 6, %v628
  %v630 = vrot.slane %v568, %v629
  %v631 = vlaneseq
  %v632 = vshrl.u32 %v631, 7
  %v633 = vsub.s32 7, %v632
  %v634 = vrot.slane %v568, %v633
  %v683 = vunpack.c.l.b16 %v535
  %v684 = vunpack.c.h.b16 %v535
  %v685 = vunpack.c.l.b16 %v536
  %v686 = vunpack.c.h.b16 %v536
  %v687 = vunpack.c.l.b16 %v537
  %v688 = vunpack.c.h.b16 %v537
  %v689 = vunpack.c.l.b16 %v538
  %v690 = vunpack.c.h.b16 %v538
  %v691 = vunpack.c.l.b16 %v539
  %v692 = vunpack.c.h.b16 %v539
  %v693 = vunpack.c.l.b16 %v540
  %v694 = vunpack.c.h.b16 %v540
  %v695 = vunpack.c.l.b16 %v541
  %v696 = vunpack.c.h.b16 %v541
  %v697 = vunpack.c.l.b16 %v542
  %v698 = vunpack.c.h.b16 %v542
  %v699 = vunpack.c.l.b16 %v543
  %v700 = vunpack.c.h.b16 %v543
  %v701 = vunpack.c.l.b16 %v544
  %v702 = vunpack.c.h.b16 %v544
  %v703 = vunpack.c.l.b16 %v545
  %v704 = vunpack.c.h.b16 %v545
  %v705 = vunpack.c.l.b16 %v546
  %v706 = vunpack.c.h.b16 %v546
  %v707 = vunpack.c.l.b16 %v547
  %v708 = vunpack.c.h.b16 %v547
  %v709 = vunpack.c.l.b16 %v548
  %v710 = vunpack.c.h.b16 %v548
  %v711 = vunpack.c.l.b16 %v549
  %v712 = vunpack.c.h.b16 %v549
  %v713 = vunpack.c.l.b16 %v550
  %v714 = vunpack.c.h.b16 %v550
  %v715 = vunpack.c.l.b16 %v551
  %v716 = vunpack.c.h.b16 %v551
  %v717 = vunpack.c.l.b16 %v552
  %v718 = vunpack.c.h.b16 %v552
  %v719 = vunpack.c.l.b16 %v553
  %v720 = vunpack.c.h.b16 %v553
  %v721 = vunpack.c.l.b16 %v554
  %v722 = vunpack.c.h.b16 %v554
  %v723 = vunpack.c.l.b16 %v555
  %v724 = vunpack.c.h.b16 %v555
  %v725 = vunpack.c.l.b16 %v556
  %v726 = vunpack.c.h.b16 %v556
  %v727 = vunpack.c.l.b16 %v557
  %v728 = vunpack.c.h.b16 %v557
  %v729 = vunpack.c.l.b16 %v558
  %v730 = vunpack.c.h.b16 %v558
  %v731 = vunpack.c.l.b16 %v559
  %v732 = vunpack.c.h.b16 %v559
  %v733 = vunpack.c.l.b16 %v560
  %v734 = vunpack.c.h.b16 %v560
  %v735 = vunpack.c.l.b16 %v561
  %v736 = vunpack.c.h.b16 %v561
  %v737 = vunpack.c.l.b16 %v562
  %v738 = vunpack.c.h.b16 %v562
  %v739 = vunpack.c.l.b16 %v563
  %v740 = vunpack.c.h.b16 %v563
  %v741 = vunpack.c.l.b16 %v564
  %v742 = vunpack.c.h.b16 %v564
  %v743 = vunpack.c.l.b16 %v565
  %v744 = vunpack.c.h.b16 %v565
  %v745 = vunpack.c.l.b16 %v566
  %v746 = vunpack.c.h.b16 %v566
  %v747 = vpack.c.b16 %v699, %v683
  %v748 = vpack.c.b16 %v700, %v684
  %v749 = vpack.c.b16 %v701, %v685
  %v750 = vpack.c.b16 %v702, %v686
  %v751 = vpack.c.b16 %v703, %v687
  %v752 = vpack.c.b16 %v704, %v688
  %v753 = vpack.c.b16 %v705, %v689
  %v754 = vpack.c.b16 %v706, %v690
  %v755 = vpack.c.b16 %v707, %v691
  %v756 = vpack.c.b16 %v708, %v692
  %v757 = vpack.c.b16 %v709, %v693
  %v758 = vpack.c.b16 %v710, %v694
  %v759 = vpack.c.b16 %v711, %v695
  %v760 = vpack.c.b16 %v712, %v696
  %v761 = vpack.c.b16 %v713, %v697
  %v762 = vpack.c.b16 %v714, %v698
  %v763 = vpack.c.b16 %v731, %v715
  %v764 = vpack.c.b16 %v732, %v716
  %v765 = vpack.c.b16 %v733, %v717
  %v766 = vpack.c.b16 %v734, %v718
  %v767 = vpack.c.b16 %v735, %v719
  %v768 = vpack.c.b16 %v736, %v720
  %v769 = vpack.c.b16 %v737, %v721
  %v770 = vpack.c.b16 %v738, %v722
  %v771 = vpack.c.b16 %v739, %v723
  %v772 = vpack.c.b16 %v740, %v724
  %v773 = vpack.c.b16 %v741, %v725
  %v774 = vpack.c.b16 %v742, %v726
  %v775 = vpack.c.b16 %v743, %v727
  %v776 = vpack.c.b16 %v744, %v728
  %v777 = vpack.c.b16 %v745, %v729
  %v778 = vpack.c.b16 %v746, %v730
  %v812 = vsel %vm185, %v534, 0
  %814 = vmatprep.subr.bf16.mxu0 %v748
  %815 = vmatpush1.bf16.msra.mxu0 %v747
  %816 = vmatprep.subr.bf16.mxu0 %v764
  %817 = vmatpush1.bf16.msra.mxu0 %v763
  %818 = vmatprep.subr.bf16.mxu0 0
  %819 = vmatpush1.bf16.msra.mxu0 0
  %820 = vmatprep.subr.bf16.mxu0 0
  %821 = vmatpush1.bf16.msra.mxu0 0
  %822 = vmatprep.subr.bf16.mxu0 0
  %823 = vmatpush1.bf16.msra.mxu0 0
  %824 = vmatprep.subr.bf16.mxu0 0
  %825 = vmatpush1.bf16.msra.mxu0 0
  %826 = vmatprep.subr.bf16.mxu0 0
  %827 = vmatpush1.bf16.msra.mxu0 0
  %828 = vmatprep.subr.bf16.mxu0 0
  %829 = vmatpush1.bf16.msra.mxu0 0
  %830 = vmatprep.subr.bf16.mxu0 0
  %831 = vmatpush1.bf16.msra.mxu0 0
  %832 = vmatprep.subr.bf16.mxu0 0
  %833 = vmatpush1.bf16.msra.mxu0 0
  %834 = vmatprep.subr.bf16.mxu0 0
  %835 = vmatpush1.bf16.msra.mxu0 0
  %836 = vmatprep.subr.bf16.mxu0 0
  %837 = vmatpush1.bf16.msra.mxu0 0
  %838 = vmatprep.subr.bf16.mxu0 0
  %839 = vmatpush1.bf16.msra.mxu0 0
  %840 = vmatprep.subr.bf16.mxu0 0
  %841 = vmatpush1.bf16.msra.mxu0 0
  %842 = vmatprep.subr.bf16.mxu0 0
  %843 = vmatpush1.bf16.msra.mxu0 0
  %844 = vmatprep.subr.bf16.mxu0 0
  %845 = vmatpush1.bf16.msra.mxu0 0
  %846 = vmatprep.mubr.bf16.mxu0 0
  %847 = vmatmul.mubr.bf16.gmra.mrb[0].mxu0 %v812
  %v848 = vpop.f32.mrb[0].mxu0
  %v849 = vadd.f32 %v574, %v848
  %v850 = vpop.f32.mrb[0].mxu0
  %v851 = vadd.f32 %v578, %v850
  %v852 = vpop.f32.mrb[0].mxu0
  %v853 = vadd.f32 %v574, %v852
  %v854 = vpop.f32.mrb[0].mxu0
  %v855 = vadd.f32 %v578, %v854
  %856 = vdwg.mxu0
  %857 = vmatprep.subr.bf16.mxu0 %v750
  %858 = vmatpush1.bf16.msra.mxu0 %v749
  %859 = vmatprep.subr.bf16.mxu0 %v766
  %860 = vmatpush1.bf16.msra.mxu0 %v765
  %861 = vmatprep.subr.bf16.mxu0 0
  %862 = vmatpush1.bf16.msra.mxu0 0
  %863 = vmatprep.subr.bf16.mxu0 0
  %864 = vmatpush1.bf16.msra.mxu0 0
  %865 = vmatprep.subr.bf16.mxu0 0
  %866 = vmatpush1.bf16.msra.mxu0 0
  %867 = vmatprep.subr.bf16.mxu0 0
  %868 = vmatpush1.bf16.msra.mxu0 0
  %869 = vmatprep.subr.bf16.mxu0 0
  %870 = vmatpush1.bf16.msra.mxu0 0
  %871 = vmatprep.subr.bf16.mxu0 0
  %872 = vmatpush1.bf16.msra.mxu0 0
  %873 = vmatprep.subr.bf16.mxu0 0
  %874 = vmatpush1.bf16.msra.mxu0 0
  %875 = vmatprep.subr.bf16.mxu0 0
  %876 = vmatpush1.bf16.msra.mxu0 0
  %877 = vmatprep.subr.bf16.mxu0 0
  %878 = vmatpush1.bf16.msra.mxu0 0
  %879 = vmatprep.subr.bf16.mxu0 0
  %880 = vmatpush1.bf16.msra.mxu0 0
  %881 = vmatprep.subr.bf16.mxu0 0
  %882 = vmatpush1.bf16.msra.mxu0 0
  %883 = vmatprep.subr.bf16.mxu0 0
  %884 = vmatpush1.bf16.msra.mxu0 0
  %885 = vmatprep.subr.bf16.mxu0 0
  %886 = vmatpush1.bf16.msra.mxu0 0
  %887 = vmatprep.subr.bf16.mxu0 0
  %888 = vmatpush1.bf16.msra.mxu0 0
  %889 = vmatprep.mubr.bf16.mxu0 0
  %890 = vmatmul.mubr.bf16.gmra.mrb[0].mxu0 %v812
  %v891 = vpop.f32.mrb[0].mxu0
  %v892 = vadd.f32 %v582, %v891
  %v893 = vpop.f32.mrb[0].mxu0
  %v894 = vadd.f32 %v586, %v893
  %v895 = vpop.f32.mrb[0].mxu0
  %v896 = vadd.f32 %v582, %v895
  %v897 = vpop.f32.mrb[0].mxu0
  %v898 = vadd.f32 %v586, %v897
  %899 = vdwg.mxu0
  %900 = vmatprep.subr.bf16.mxu0 %v752
  %901 = vmatpush1.bf16.msra.mxu0 %v751
  %902 = vmatprep.subr.bf16.mxu0 %v768
  %903 = vmatpush1.bf16.msra.mxu0 %v767
  %904 = vmatprep.subr.bf16.mxu0 0
  %905 = vmatpush1.bf16.msra.mxu0 0
  %906 = vmatprep.subr.bf16.mxu0 0
  %907 = vmatpush1.bf16.msra.mxu0 0
  %908 = vmatprep.subr.bf16.mxu0 0
  %909 = vmatpush1.bf16.msra.mxu0 0
  %910 = vmatprep.subr.bf16.mxu0 0
  %911 = vmatpush1.bf16.msra.mxu0 0
  %912 = vmatprep.subr.bf16.mxu0 0
  %913 = vmatpush1.bf16.msra.mxu0 0
  %914 = vmatprep.subr.bf16.mxu0 0
  %915 = vmatpush1.bf16.msra.mxu0 0
  %916 = vmatprep.subr.bf16.mxu0 0
  %917 = vmatpush1.bf16.msra.mxu0 0
  %918 = vmatprep.subr.bf16.mxu0 0
  %919 = vmatpush1.bf16.msra.mxu0 0
  %920 = vmatprep.subr.bf16.mxu0 0
  %921 = vmatpush1.bf16.msra.mxu0 0
  %922 = vmatprep.subr.bf16.mxu0 0
  %923 = vmatpush1.bf16.msra.mxu0 0
  %924 = vmatprep.subr.bf16.mxu0 0
  %925 = vmatpush1.bf16.msra.mxu0 0
  %926 = vmatprep.subr.bf16.mxu0 0
  %927 = vmatpush1.bf16.msra.mxu0 0
  %928 = vmatprep.subr.bf16.mxu0 0
  %929 = vmatpush1.bf16.msra.mxu0 0
  %930 = vmatprep.subr.bf16.mxu0 0
  %931 = vmatpush1.bf16.msra.mxu0 0
  %932 = vmatprep.mubr.bf16.mxu0 0
  %933 = vmatmul.mubr.bf16.gmra.mrb[0].mxu0 %v812
  %v934 = vpop.f32.mrb[0].mxu0
  %v935 = vadd.f32 %v590, %v934
  %v936 = vpop.f32.mrb[0].mxu0
  %v937 = vadd.f32 %v594, %v936
  %v938 = vpop.f32.mrb[0].mxu0
  %v939 = vadd.f32 %v590, %v938
  %v940 = vpop.f32.mrb[0].mxu0
  %v941 = vadd.f32 %v594, %v940
  %942 = vdwg.mxu0
  %943 = vmatprep.subr.bf16.mxu0 %v754
  %944 = vmatpush1.bf16.msra.mxu0 %v753
  %945 = vmatprep.subr.bf16.mxu0 %v770
  %946 = vmatpush1.bf16.msra.mxu0 %v769
  %947 = vmatprep.subr.bf16.mxu0 0
  %948 = vmatpush1.bf16.msra.mxu0 0
  %949 = vmatprep.subr.bf16.mxu0 0
  %950 = vmatpush1.bf16.msra.mxu0 0
  %951 = vmatprep.subr.bf16.mxu0 0
  %952 = vmatpush1.bf16.msra.mxu0 0
  %953 = vmatprep.subr.bf16.mxu0 0
  %954 = vmatpush1.bf16.msra.mxu0 0
  %955 = vmatprep.subr.bf16.mxu0 0
  %956 = vmatpush1.bf16.msra.mxu0 0
  %957 = vmatprep.subr.bf16.mxu0 0
  %958 = vmatpush1.bf16.msra.mxu0 0
  %959 = vmatprep.subr.bf16.mxu0 0
  %960 = vmatpush1.bf16.msra.mxu0 0
  %961 = vmatprep.subr.bf16.mxu0 0
  %962 = vmatpush1.bf16.msra.mxu0 0
  %963 = vmatprep.subr.bf16.mxu0 0
  %964 = vmatpush1.bf16.msra.mxu0 0
  %965 = vmatprep.subr.bf16.mxu0 0
  %966 = vmatpush1.bf16.msra.mxu0 0
  %967 = vmatprep.subr.bf16.mxu0 0
  %968 = vmatpush1.bf16.msra.mxu0 0
  %969 = vmatprep.subr.bf16.mxu0 0
  %970 = vmatpush1.bf16.msra.mxu0 0
  %971 = vmatprep.subr.bf16.mxu0 0
  %972 = vmatpush1.bf16.msra.mxu0 0
  %973 = vmatprep.subr.bf16.mxu0 0
  %974 = vmatpush1.bf16.msra.mxu0 0
  %975 = vmatprep.mubr.bf16.mxu0 0
  %976 = vmatmul.mubr.bf16.gmra.mrb[0].mxu0 %v812
  %v977 = vpop.f32.mrb[0].mxu0
  %v978 = vadd.f32 %v598, %v977
  %v979 = vpop.f32.mrb[0].mxu0
  %v980 = vadd.f32 %v602, %v979
  %v981 = vpop.f32.mrb[0].mxu0
  %v982 = vadd.f32 %v598, %v981
  %v983 = vpop.f32.mrb[0].mxu0
  %v984 = vadd.f32 %v602, %v983
  %985 = vdwg.mxu0
  %986 = vmatprep.subr.bf16.mxu0 %v756
  %987 = vmatpush1.bf16.msra.mxu0 %v755
  %988 = vmatprep.subr.bf16.mxu0 %v772
  %989 = vmatpush1.bf16.msra.mxu0 %v771
  %990 = vmatprep.subr.bf16.mxu0 0
  %991 = vmatpush1.bf16.msra.mxu0 0
  %992 = vmatprep.subr.bf16.mxu0 0
  %993 = vmatpush1.bf16.msra.mxu0 0
  %994 = vmatprep.subr.bf16.mxu0 0
  %995 = vmatpush1.bf16.msra.mxu0 0
  %996 = vmatprep.subr.bf16.mxu0 0
  %997 = vmatpush1.bf16.msra.mxu0 0
  %998 = vmatprep.subr.bf16.mxu0 0
  %999 = vmatpush1.bf16.msra.mxu0 0
  %1000 = vmatprep.subr.bf16.mxu0 0
  %1001 = vmatpush1.bf16.msra.mxu0 0
  %1002 = vmatprep.subr.bf16.mxu0 0
  %1003 = vmatpush1.bf16.msra.mxu0 0
  %1004 = vmatprep.subr.bf16.mxu0 0
  %1005 = vmatpush1.bf16.msra.mxu0 0
  %1006 = vmatprep.subr.bf16.mxu0 0
  %1007 = vmatpush1.bf16.msra.mxu0 0
  %1008 = vmatprep.subr.bf16.mxu0 0
  %1009 = vmatpush1.bf16.msra.mxu0 0
  %1010 = vmatprep.subr.bf16.mxu0 0
  %1011 = vmatpush1.bf16.msra.mxu0 0
  %1012 = vmatprep.subr.bf16.mxu0 0
  %1013 = vmatpush1.bf16.msra.mxu0 0
  %1014 = vmatprep.subr.bf16.mxu0 0
  %1015 = vmatpush1.bf16.msra.mxu0 0
  %1016 = vmatprep.subr.bf16.mxu0 0
  %1017 = vmatpush1.bf16.msra.mxu0 0
  %1018 = vmatprep.mubr.bf16.mxu0 0
  %1019 = vmatmul.mubr.bf16.gmra.mrb[0].mxu0 %v812
  %v1020 = vpop.f32.mrb[0].mxu0
  %v1021 = vadd.f32 %v606, %v1020
  %v1022 = vpop.f32.mrb[0].mxu0
  %v1023 = vadd.f32 %v610, %v1022
  %v1024 = vpop.f32.mrb[0].mxu0
  %v1025 = vadd.f32 %v606, %v1024
  %v1026 = vpop.f32.mrb[0].mxu0
  %v1027 = vadd.f32 %v610, %v1026
  %1028 = vdwg.mxu0
  %1029 = vmatprep.subr.bf16.mxu0 %v758
  %1030 = vmatpush1.bf16.msra.mxu0 %v757
  %1031 = vmatprep.subr.bf16.mxu0 %v774
  %1032 = vmatpush1.bf16.msra.mxu0 %v773
  %1033 = vmatprep.subr.bf16.mxu0 0
  %1034 = vmatpush1.bf16.msra.mxu0 0
  %1035 = vmatprep.subr.bf16.mxu0 0
  %1036 = vmatpush1.bf16.msra.mxu0 0
  %1037 = vmatprep.subr.bf16.mxu0 0
  %1038 = vmatpush1.bf16.msra.mxu0 0
  %1039 = vmatprep.subr.bf16.mxu0 0
  %1040 = vmatpush1.bf16.msra.mxu0 0
  %1041 = vmatprep.subr.bf16.mxu0 0
  %1042 = vmatpush1.bf16.msra.mxu0 0
  %1043 = vmatprep.subr.bf16.mxu0 0
  %1044 = vmatpush1.bf16.msra.mxu0 0
  %1045 = vmatprep.subr.bf16.mxu0 0
  %1046 = vmatpush1.bf16.msra.mxu0 0
  %1047 = vmatprep.subr.bf16.mxu0 0
  %1048 = vmatpush1.bf16.msra.mxu0 0
  %1049 = vmatprep.subr.bf16.mxu0 0
  %1050 = vmatpush1.bf16.msra.mxu0 0
  %1051 = vmatprep.subr.bf16.mxu0 0
  %1052 = vmatpush1.bf16.msra.mxu0 0
  %1053 = vmatprep.subr.bf16.mxu0 0
  %1054 = vmatpush1.bf16.msra.mxu0 0
  %1055 = vmatprep.subr.bf16.mxu0 0
  %1056 = vmatpush1.bf16.msra.mxu0 0
  %1057 = vmatprep.subr.bf16.mxu0 0
  %1058 = vmatpush1.bf16.msra.mxu0 0
  %1059 = vmatprep.subr.bf16.mxu0 0
  %1060 = vmatpush1.bf16.msra.mxu0 0
  %1061 = vmatprep.mubr.bf16.mxu0 0
  %1062 = vmatmul.mubr.bf16.gmra.mrb[0].mxu0 %v812
  %v1063 = vpop.f32.mrb[0].mxu0
  %v1064 = vadd.f32 %v614, %v1063
  %v1065 = vpop.f32.mrb[0].mxu0
  %v1066 = vadd.f32 %v618, %v1065
  %v1067 = vpop.f32.mrb[0].mxu0
  %v1068 = vadd.f32 %v614, %v1067
  %v1069 = vpop.f32.mrb[0].mxu0
  %v1070 = vadd.f32 %v618, %v1069
  %1071 = vdwg.mxu0
  %1072 = vmatprep.subr.bf16.mxu0 %v760
  %1073 = vmatpush1.bf16.msra.mxu0 %v759
  %1074 = vmatprep.subr.bf16.mxu0 %v776
  %1075 = vmatpush1.bf16.msra.mxu0 %v775
  %1076 = vmatprep.subr.bf16.mxu0 0
  %1077 = vmatpush1.bf16.msra.mxu0 0
  %1078 = vmatprep.subr.bf16.mxu0 0
  %1079 = vmatpush1.bf16.msra.mxu0 0
  %1080 = vmatprep.subr.bf16.mxu0 0
  %1081 = vmatpush1.bf16.msra.mxu0 0
  %1082 = vmatprep.subr.bf16.mxu0 0
  %1083 = vmatpush1.bf16.msra.mxu0 0
  %1084 = vmatprep.subr.bf16.mxu0 0
  %1085 = vmatpush1.bf16.msra.mxu0 0
  %1086 = vmatprep.subr.bf16.mxu0 0
  %1087 = vmatpush1.bf16.msra.mxu0 0
  %1088 = vmatprep.subr.bf16.mxu0 0
  %1089 = vmatpush1.bf16.msra.mxu0 0
  %1090 = vmatprep.subr.bf16.mxu0 0
  %1091 = vmatpush1.bf16.msra.mxu0 0
  %1092 = vmatprep.subr.bf16.mxu0 0
  %1093 = vmatpush1.bf16.msra.mxu0 0
  %1094 = vmatprep.subr.bf16.mxu0 0
  %1095 = vmatpush1.bf16.msra.mxu0 0
  %1096 = vmatprep.subr.bf16.mxu0 0
  %1097 = vmatpush1.bf16.msra.mxu0 0
  %1098 = vmatprep.subr.bf16.mxu0 0
  %1099 = vmatpush1.bf16.msra.mxu0 0
  %1100 = vmatprep.subr.bf16.mxu0 0
  %1101 = vmatpush1.bf16.msra.mxu0 0
  %1102 = vmatprep.subr.bf16.mxu0 0
  %1103 = vmatpush1.bf16.msra.mxu0 0
  %1104 = vmatprep.mubr.bf16.mxu0 0
  %1105 = vmatmul.mubr.bf16.gmra.mrb[0].mxu0 %v812
  %v1106 = vpop.f32.mrb[0].mxu0
  %v1107 = vadd.f32 %v622, %v1106
  %v1108 = vpop.f32.mrb[0].mxu0
  %v1109 = vadd.f32 %v626, %v1108
  %v1110 = vpop.f32.mrb[0].mxu0
  %v1111 = vadd.f32 %v622, %v1110
  %v1112 = vpop.f32.mrb[0].mxu0
  %v1113 = vadd.f32 %v626, %v1112
  %1114 = vdwg.mxu0
  %1115 = vmatprep.subr.bf16.mxu0 %v762
  %1116 = vmatpush1.bf16.msra.mxu0 %v761
  %1117 = vmatprep.subr.bf16.mxu0 %v778
  %1118 = vmatpush1.bf16.msra.mxu0 %v777
  %1119 = vmatprep.subr.bf16.mxu0 0
  %1120 = vmatpush1.bf16.msra.mxu0 0
  %1121 = vmatprep.subr.bf16.mxu0 0
  %1122 = vmatpush1.bf16.msra.mxu0 0
  %1123 = vmatprep.subr.bf16.mxu0 0
  %1124 = vmatpush1.bf16.msra.mxu0 0
  %1125 = vmatprep.subr.bf16.mxu0 0
  %1126 = vmatpush1.bf16.msra.mxu0 0
  %1127 = vmatprep.subr.bf16.mxu0 0
  %1128 = vmatpush1.bf16.msra.mxu0 0
  %1129 = vmatprep.subr.bf16.mxu0 0
  %1130 = vmatpush1.bf16.msra.mxu0 0
  %1131 = vmatprep.subr.bf16.mxu0 0
  %1132 = vmatpush1.bf16.msra.mxu0 0
  %1133 = vmatprep.subr.bf16.mxu0 0
  %1134 = vmatpush1.bf16.msra.mxu0 0
  %1135 = vmatprep.subr.bf16.mxu0 0
  %1136 = vmatpush1.bf16.msra.mxu0 0
  %1137 = vmatprep.subr.bf16.mxu0 0
  %1138 = vmatpush1.bf16.msra.mxu0 0
  %1139 = vmatprep.subr.bf16.mxu0 0
  %1140 = vmatpush1.bf16.msra.mxu0 0
  %1141 = vmatprep.subr.bf16.mxu0 0
  %1142 = vmatpush1.bf16.msra.mxu0 0
  %1143 = vmatprep.subr.bf16.mxu0 0
  %1144 = vmatpush1.bf16.msra.mxu0 0
  %1145 = vmatprep.subr.bf16.mxu0 0
  %1146 = vmatpush1.bf16.msra.mxu0 0
  %1147 = vmatprep.mubr.bf16.mxu0 0
  %1148 = vmatmul.mubr.bf16.gmra.mrb[0].mxu0 %v812
  %v1149 = vpop.f32.mrb[0].mxu0
  %v1150 = vadd.f32 %v630, %v1149
  %v1151 = vpop.f32.mrb[0].mxu0
  %v1152 = vadd.f32 %v634, %v1151
  %v1153 = vpop.f32.mrb[0].mxu0
  %v1154 = vadd.f32 %v630, %v1153
  %v1155 = vpop.f32.mrb[0].mxu0
  %v1156 = vadd.f32 %v634, %v1155
  %1157 = vdwg.mxu0
  %v1158 = vmax.f32 %v849, 0.0
  %v1159 = vmax.f32 %v851, 0.0
  %v1160 = vmax.f32 %v892, 0.0
  %v1161 = vmax.f32 %v894, 0.0
  %v1162 = vmax.f32 %v935, 0.0
  %v1163 = vmax.f32 %v937, 0.0
  %v1164 = vmax.f32 %v978, 0.0
  %v1165 = vmax.f32 %v980, 0.0
  %v1166 = vmax.f32 %v1021, 0.0
  %v1167 = vmax.f32 %v1023, 0.0
  %v1168 = vmax.f32 %v1064, 0.0
  %v1169 = vmax.f32 %v1066, 0.0
  %v1170 = vmax.f32 %v1107, 0.0
  %v1171 = vmax.f32 %v1109, 0.0
  %v1172 = vmax.f32 %v1150, 0.0
  %v1173 = vmax.f32 %v1152, 0.0
  %v1174 = vmax.f32 %v853, 0.0
  %v1175 = vmax.f32 %v855, 0.0
  %v1176 = vmax.f32 %v896, 0.0
  %v1177 = vmax.f32 %v898, 0.0
  %v1178 = vmax.f32 %v939, 0.0
  %v1179 = vmax.f32 %v941, 0.0
  %v1180 = vmax.f32 %v982, 0.0
  %v1181 = vmax.f32 %v984, 0.0
  %v1182 = vmax.f32 %v1025, 0.0
  %v1183 = vmax.f32 %v1027, 0.0
  %v1184 = vmax.f32 %v1068, 0.0
  %v1185 = vmax.f32 %v1070, 0.0
  %v1186 = vmax.f32 %v1111, 0.0
  %v1187 = vmax.f32 %v1113, 0.0
  %v1188 = vmax.f32 %v1154, 0.0
  %v1189 = vmax.f32 %v1156, 0.0
  %v1190 = vpack.c.bf16 %v1174, %v1158
  %v1191 = vpack.c.bf16 %v1175, %v1159
  %v1192 = vpack.c.bf16 %v1176, %v1160
  %v1193 = vpack.c.bf16 %v1177, %v1161
  %v1194 = vpack.c.bf16 %v1178, %v1162
  %v1195 = vpack.c.bf16 %v1179, %v1163
  %v1196 = vpack.c.bf16 %v1180, %v1164
  %v1197 = vpack.c.bf16 %v1181, %v1165
  %v1198 = vpack.c.bf16 %v1182, %v1166
  %v1199 = vpack.c.bf16 %v1183, %v1167
  %v1200 = vpack.c.bf16 %v1184, %v1168
  %v1201 = vpack.c.bf16 %v1185, %v1169
  %v1202 = vpack.c.bf16 %v1186, %v1170
  %v1203 = vpack.c.bf16 %v1187, %v1171
  %v1204 = vpack.c.bf16 %v1188, %v1172
  %v1205 = vpack.c.bf16 %v1189, %v1173
  %v1206 = vld [vmem:[%s5] sm:$0xf]
  %v1207 = vld [vmem:[%s5 + $0x4] sm:$0xf]
  %v1208 = vld [vmem:[%s5 + $0x8] sm:$0xf]
  %v1209 = vld [vmem:[%s5 + $0xc] sm:$0xf]
  %v1210 = vld [vmem:[%s5 + $0x10] sm:$0xf]
  %v1211 = vld [vmem:[%s5 + $0x14] sm:$0xf]
  %v1212 = vld [vmem:[%s5 + $0x18] sm:$0xf]
  %v1213 = vld [vmem:[%s5 + $0x1c] sm:$0xf]
  %v1214 = vld [vmem:[%s5 + $0x20] sm:$0xf]
  %v1215 = vld [vmem:[%s5 + $0x24] sm:$0xf]
  %v1216 = vld [vmem:[%s5 + $0x28] sm:$0xf]
  %v1217 = vld [vmem:[%s5 + $0x2c] sm:$0xf]
  %v1218 = vld [vmem:[%s5 + $0x30] sm:$0xf]
  %v1219 = vld [vmem:[%s5 + $0x34] sm:$0xf]
  %v1220 = vld [vmem:[%s5 + $0x38] sm:$0xf]
  %v1221 = vld [vmem:[%s5 + $0x3c] sm:$0xf]
  %v1222 = vld [vmem:[%s5 + $0x40] sm:$0xf]
  %v1223 = vld [vmem:[%s5 + $0x44] sm:$0xf]
  %v1224 = vld [vmem:[%s5 + $0x48] sm:$0xf]
  %v1225 = vld [vmem:[%s5 + $0x4c] sm:$0xf]
  %v1226 = vld [vmem:[%s5 + $0x50] sm:$0xf]
  %v1227 = vld [vmem:[%s5 + $0x54] sm:$0xf]
  %v1228 = vld [vmem:[%s5 + $0x58] sm:$0xf]
  %v1229 = vld [vmem:[%s5 + $0x5c] sm:$0xf]
  %v1230 = vld [vmem:[%s5 + $0x60] sm:$0xf]
  %v1231 = vld [vmem:[%s5 + $0x64] sm:$0xf]
  %v1232 = vld [vmem:[%s5 + $0x68] sm:$0xf]
  %v1233 = vld [vmem:[%s5 + $0x6c] sm:$0xf]
  %v1234 = vld [vmem:[%s5 + $0x70] sm:$0xf]
  %v1235 = vld [vmem:[%s5 + $0x74] sm:$0xf]
  %v1236 = vld [vmem:[%s5 + $0x78] sm:$0xf]
  %v1237 = vld [vmem:[%s5 + $0x7c] sm:$0xf]
  %v1238 = vld [vmem:[%s5 + $0x80] sm:$0xf]
  %v1239 = vld [vmem:[%s5 + $0x84] sm:$0xf]
  %v1240 = vld [vmem:[%s5 + $0x88] sm:$0xf]
  %v1241 = vld [vmem:[%s5 + $0x8c] sm:$0xf]
  %v1242 = vld [vmem:[%s5 + $0x90] sm:$0xf]
  %v1243 = vld [vmem:[%s5 + $0x94] sm:$0xf]
  %v1244 = vld [vmem:[%s5 + $0x98] sm:$0xf]
  %v1245 = vld [vmem:[%s5 + $0x9c] sm:$0xf]
  %v1246 = vld [vmem:[%s5 + $0xa0] sm:$0xf]
  %v1247 = vld [vmem:[%s5 + $0xa4] sm:$0xf]
  %v1248 = vld [vmem:[%s5 + $0xa8] sm:$0xf]
  %v1249 = vld [vmem:[%s5 + $0xac] sm:$0xf]
  %v1250 = vld [vmem:[%s5 + $0xb0] sm:$0xf]
  %v1251 = vld [vmem:[%s5 + $0xb4] sm:$0xf]
  %v1252 = vld [vmem:[%s5 + $0xb8] sm:$0xf]
  %v1253 = vld [vmem:[%s5 + $0xbc] sm:$0xf]
  %v1254 = vld [vmem:[%s5 + $0xc0] sm:$0xf]
  %v1255 = vld [vmem:[%s5 + $0xc4] sm:$0xf]
  %v1256 = vld [vmem:[%s5 + $0xc8] sm:$0xf]
  %v1257 = vld [vmem:[%s5 + $0xcc] sm:$0xf]
  %v1258 = vld [vmem:[%s5 + $0xd0] sm:$0xf]
  %v1259 = vld [vmem:[%s5 + $0xd4] sm:$0xf]
  %v1260 = vld [vmem:[%s5 + $0xd8] sm:$0xf]
  %v1261 = vld [vmem:[%s5 + $0xdc] sm:$0xf]
  %v1262 = vld [vmem:[%s5 + $0xe0] sm:$0xf]
  %v1263 = vld [vmem:[%s5 + $0xe4] sm:$0xf]
  %v1264 = vld [vmem:[%s5 + $0xe8] sm:$0xf]
  %v1265 = vld [vmem:[%s5 + $0xec] sm:$0xf]
  %v1266 = vld [vmem:[%s5 + $0xf0] sm:$0xf]
  %v1267 = vld [vmem:[%s5 + $0xf4] sm:$0xf]
  %v1268 = vld [vmem:[%s5 + $0xf8] sm:$0xf]
  %v1269 = vld [vmem:[%s5 + $0xfc] sm:$0xf]
  %v1270 = vld [vmem:[%s5 + $0x100] sm:$0xf]
  %v1271 = vld [vmem:[%s5 + $0x104] sm:$0xf]
  %v1272 = vld [vmem:[%s5 + $0x108] sm:$0xf]
  %v1273 = vld [vmem:[%s5 + $0x10c] sm:$0xf]
  %v1274 = vld [vmem:[%s5 + $0x110] sm:$0xf]
  %v1275 = vld [vmem:[%s5 + $0x114] sm:$0xf]
  %v1276 = vld [vmem:[%s5 + $0x118] sm:$0xf]
  %v1277 = vld [vmem:[%s5 + $0x11c] sm:$0xf]
  %v1278 = vld [vmem:[%s5 + $0x120] sm:$0xf]
  %v1279 = vld [vmem:[%s5 + $0x124] sm:$0xf]
  %v1280 = vld [vmem:[%s5 + $0x128] sm:$0xf]
  %v1281 = vld [vmem:[%s5 + $0x12c] sm:$0xf]
  %v1282 = vld [vmem:[%s5 + $0x130] sm:$0xf]
  %v1283 = vld [vmem:[%s5 + $0x134] sm:$0xf]
  %v1284 = vld [vmem:[%s5 + $0x138] sm:$0xf]
  %v1285 = vld [vmem:[%s5 + $0x13c] sm:$0xf]
  %v1286 = vld [vmem:[%s5 + $0x140] sm:$0xf]
  %v1287 = vld [vmem:[%s5 + $0x144] sm:$0xf]
  %v1288 = vld [vmem:[%s5 + $0x148] sm:$0xf]
  %v1289 = vld [vmem:[%s5 + $0x14c] sm:$0xf]
  %v1290 = vld [vmem:[%s5 + $0x150] sm:$0xf]
  %v1291 = vld [vmem:[%s5 + $0x154] sm:$0xf]
  %v1292 = vld [vmem:[%s5 + $0x158] sm:$0xf]
  %v1293 = vld [vmem:[%s5 + $0x15c] sm:$0xf]
  %v1294 = vld [vmem:[%s5 + $0x160] sm:$0xf]
  %v1295 = vld [vmem:[%s5 + $0x164] sm:$0xf]
  %v1296 = vld [vmem:[%s5 + $0x168] sm:$0xf]
  %v1297 = vld [vmem:[%s5 + $0x16c] sm:$0xf]
  %v1298 = vld [vmem:[%s5 + $0x170] sm:$0xf]
  %v1299 = vld [vmem:[%s5 + $0x174] sm:$0xf]
  %v1300 = vld [vmem:[%s5 + $0x178] sm:$0xf]
  %v1301 = vld [vmem:[%s5 + $0x17c] sm:$0xf]
  %v1302 = vld [vmem:[%s5 + $0x180] sm:$0xf]
  %v1303 = vld [vmem:[%s5 + $0x184] sm:$0xf]
  %v1304 = vld [vmem:[%s5 + $0x188] sm:$0xf]
  %v1305 = vld [vmem:[%s5 + $0x18c] sm:$0xf]
  %v1306 = vld [vmem:[%s5 + $0x190] sm:$0xf]
  %v1307 = vld [vmem:[%s5 + $0x194] sm:$0xf]
  %v1308 = vld [vmem:[%s5 + $0x198] sm:$0xf]
  %v1309 = vld [vmem:[%s5 + $0x19c] sm:$0xf]
  %v1310 = vld [vmem:[%s5 + $0x1a0] sm:$0xf]
  %v1311 = vld [vmem:[%s5 + $0x1a4] sm:$0xf]
  %v1312 = vld [vmem:[%s5 + $0x1a8] sm:$0xf]
  %v1313 = vld [vmem:[%s5 + $0x1ac] sm:$0xf]
  %v1314 = vld [vmem:[%s5 + $0x1b0] sm:$0xf]
  %v1315 = vld [vmem:[%s5 + $0x1b4] sm:$0xf]
  %v1316 = vld [vmem:[%s5 + $0x1b8] sm:$0xf]
  %v1317 = vld [vmem:[%s5 + $0x1bc] sm:$0xf]
  %v1318 = vld [vmem:[%s5 + $0x1c0] sm:$0xf]
  %v1319 = vld [vmem:[%s5 + $0x1c4] sm:$0xf]
  %v1320 = vld [vmem:[%s5 + $0x1c8] sm:$0xf]
  %v1321 = vld [vmem:[%s5 + $0x1cc] sm:$0xf]
  %v1322 = vld [vmem:[%s5 + $0x1d0] sm:$0xf]
  %v1323 = vld [vmem:[%s5 + $0x1d4] sm:$0xf]
  %v1324 = vld [vmem:[%s5 + $0x1d8] sm:$0xf]
  %v1325 = vld [vmem:[%s5 + $0x1dc] sm:$0xf]
  %v1326 = vld [vmem:[%s5 + $0x1e0] sm:$0xf]
  %v1327 = vld [vmem:[%s5 + $0x1e4] sm:$0xf]
  %v1328 = vld [vmem:[%s5 + $0x1e8] sm:$0xf]
  %v1329 = vld [vmem:[%s5 + $0x1ec] sm:$0xf]
  %v1330 = vld [vmem:[%s5 + $0x1f0] sm:$0xf]
  %v1331 = vld [vmem:[%s5 + $0x1f4] sm:$0xf]
  %v1332 = vld [vmem:[%s5 + $0x1f8] sm:$0xf]
  %v1333 = vld [vmem:[%s5 + $0x1fc] sm:$0xf]
  %v1334 = vld [vmem:[%s5 + $0x200] sm:$0xf]
  %v1335 = vld [vmem:[%s5 + $0x204] sm:$0xf]
  %v1336 = vld [vmem:[%s5 + $0x208] sm:$0xf]
  %v1337 = vld [vmem:[%s5 + $0x20c] sm:$0xf]
  %v1338 = vld [vmem:[%s5 + $0x210] sm:$0xf]
  %v1339 = vld [vmem:[%s5 + $0x214] sm:$0xf]
  %v1340 = vld [vmem:[%s5 + $0x218] sm:$0xf]
  %v1341 = vld [vmem:[%s5 + $0x21c] sm:$0xf]
  %v1342 = vld [vmem:[%s5 + $0x220] sm:$0xf]
  %v1343 = vld [vmem:[%s5 + $0x224] sm:$0xf]
  %v1344 = vld [vmem:[%s5 + $0x228] sm:$0xf]
  %v1345 = vld [vmem:[%s5 + $0x22c] sm:$0xf]
  %v1346 = vld [vmem:[%s5 + $0x230] sm:$0xf]
  %v1347 = vld [vmem:[%s5 + $0x234] sm:$0xf]
  %v1348 = vld [vmem:[%s5 + $0x238] sm:$0xf]
  %v1349 = vld [vmem:[%s5 + $0x23c] sm:$0xf]
  %v1350 = vld [vmem:[%s5 + $0x240] sm:$0xf]
  %v1351 = vld [vmem:[%s5 + $0x244] sm:$0xf]
  %v1352 = vld [vmem:[%s5 + $0x248] sm:$0xf]
  %v1353 = vld [vmem:[%s5 + $0x24c] sm:$0xf]
  %v1354 = vld [vmem:[%s5 + $0x250] sm:$0xf]
  %v1355 = vld [vmem:[%s5 + $0x254] sm:$0xf]
  %v1356 = vld [vmem:[%s5 + $0x258] sm:$0xf]
  %v1357 = vld [vmem:[%s5 + $0x25c] sm:$0xf]
  %v1358 = vld [vmem:[%s5 + $0x260] sm:$0xf]
  %v1359 = vld [vmem:[%s5 + $0x264] sm:$0xf]
  %v1360 = vld [vmem:[%s5 + $0x268] sm:$0xf]
  %v1361 = vld [vmem:[%s5 + $0x26c] sm:$0xf]
  %v1362 = vld [vmem:[%s5 + $0x270] sm:$0xf]
  %v1363 = vld [vmem:[%s5 + $0x274] sm:$0xf]
  %v1364 = vld [vmem:[%s5 + $0x278] sm:$0xf]
  %v1365 = vld [vmem:[%s5 + $0x27c] sm:$0xf]
  %v1366 = vld [vmem:[%s5 + $0x280] sm:$0xf]
  %v1367 = vld [vmem:[%s5 + $0x284] sm:$0xf]
  %v1368 = vld [vmem:[%s5 + $0x288] sm:$0xf]
  %v1369 = vld [vmem:[%s5 + $0x28c] sm:$0xf]
  %v1370 = vld [vmem:[%s5 + $0x290] sm:$0xf]
  %v1371 = vld [vmem:[%s5 + $0x294] sm:$0xf]
  %v1372 = vld [vmem:[%s5 + $0x298] sm:$0xf]
  %v1373 = vld [vmem:[%s5 + $0x29c] sm:$0xf]
  %v1374 = vld [vmem:[%s5 + $0x2a0] sm:$0xf]
  %v1375 = vld [vmem:[%s5 + $0x2a4] sm:$0xf]
  %v1376 = vld [vmem:[%s5 + $0x2a8] sm:$0xf]
  %v1377 = vld [vmem:[%s5 + $0x2ac] sm:$0xf]
  %v1378 = vld [vmem:[%s5 + $0x2b0] sm:$0xf]
  %v1379 = vld [vmem:[%s5 + $0x2b4] sm:$0xf]
  %v1380 = vld [vmem:[%s5 + $0x2b8] sm:$0xf]
  %v1381 = vld [vmem:[%s5 + $0x2bc] sm:$0xf]
  %v1382 = vld [vmem:[%s5 + $0x2c0] sm:$0xf]
  %v1383 = vld [vmem:[%s5 + $0x2c4] sm:$0xf]
  %v1384 = vld [vmem:[%s5 + $0x2c8] sm:$0xf]
  %v1385 = vld [vmem:[%s5 + $0x2cc] sm:$0xf]
  %v1386 = vld [vmem:[%s5 + $0x2d0] sm:$0xf]
  %v1387 = vld [vmem:[%s5 + $0x2d4] sm:$0xf]
  %v1388 = vld [vmem:[%s5 + $0x2d8] sm:$0xf]
  %v1389 = vld [vmem:[%s5 + $0x2dc] sm:$0xf]
  %v1390 = vld [vmem:[%s5 + $0x2e0] sm:$0xf]
  %v1391 = vld [vmem:[%s5 + $0x2e4] sm:$0xf]
  %v1392 = vld [vmem:[%s5 + $0x2e8] sm:$0xf]
  %v1393 = vld [vmem:[%s5 + $0x2ec] sm:$0xf]
  %v1394 = vld [vmem:[%s5 + $0x2f0] sm:$0xf]
  %v1395 = vld [vmem:[%s5 + $0x2f4] sm:$0xf]
  %v1396 = vld [vmem:[%s5 + $0x2f8] sm:$0xf]
  %v1397 = vld [vmem:[%s5 + $0x2fc] sm:$0xf]
  %v1398 = vld [vmem:[%s5 + $0x300] sm:$0xf]
  %v1399 = vld [vmem:[%s5 + $0x304] sm:$0xf]
  %v1400 = vld [vmem:[%s5 + $0x308] sm:$0xf]
  %v1401 = vld [vmem:[%s5 + $0x30c] sm:$0xf]
  %v1402 = vld [vmem:[%s5 + $0x310] sm:$0xf]
  %v1403 = vld [vmem:[%s5 + $0x314] sm:$0xf]
  %v1404 = vld [vmem:[%s5 + $0x318] sm:$0xf]
  %v1405 = vld [vmem:[%s5 + $0x31c] sm:$0xf]
  %v1406 = vld [vmem:[%s5 + $0x320] sm:$0xf]
  %v1407 = vld [vmem:[%s5 + $0x324] sm:$0xf]
  %v1408 = vld [vmem:[%s5 + $0x328] sm:$0xf]
  %v1409 = vld [vmem:[%s5 + $0x32c] sm:$0xf]
  %v1410 = vld [vmem:[%s5 + $0x330] sm:$0xf]
  %v1411 = vld [vmem:[%s5 + $0x334] sm:$0xf]
  %v1412 = vld [vmem:[%s5 + $0x338] sm:$0xf]
  %v1413 = vld [vmem:[%s5 + $0x33c] sm:$0xf]
  %v1414 = vld [vmem:[%s5 + $0x340] sm:$0xf]
  %v1415 = vld [vmem:[%s5 + $0x344] sm:$0xf]
  %v1416 = vld [vmem:[%s5 + $0x348] sm:$0xf]
  %v1417 = vld [vmem:[%s5 + $0x34c] sm:$0xf]
  %v1418 = vld [vmem:[%s5 + $0x350] sm:$0xf]
  %v1419 = vld [vmem:[%s5 + $0x354] sm:$0xf]
  %v1420 = vld [vmem:[%s5 + $0x358] sm:$0xf]
  %v1421 = vld [vmem:[%s5 + $0x35c] sm:$0xf]
  %v1422 = vld [vmem:[%s5 + $0x360] sm:$0xf]
  %v1423 = vld [vmem:[%s5 + $0x364] sm:$0xf]
  %v1424 = vld [vmem:[%s5 + $0x368] sm:$0xf]
  %v1425 = vld [vmem:[%s5 + $0x36c] sm:$0xf]
  %v1426 = vld [vmem:[%s5 + $0x370] sm:$0xf]
  %v1427 = vld [vmem:[%s5 + $0x374] sm:$0xf]
  %v1428 = vld [vmem:[%s5 + $0x378] sm:$0xf]
  %v1429 = vld [vmem:[%s5 + $0x37c] sm:$0xf]
  %v1430 = vld [vmem:[%s5 + $0x380] sm:$0xf]
  %v1431 = vld [vmem:[%s5 + $0x384] sm:$0xf]
  %v1432 = vld [vmem:[%s5 + $0x388] sm:$0xf]
  %v1433 = vld [vmem:[%s5 + $0x38c] sm:$0xf]
  %v1434 = vld [vmem:[%s5 + $0x390] sm:$0xf]
  %v1435 = vld [vmem:[%s5 + $0x394] sm:$0xf]
  %v1436 = vld [vmem:[%s5 + $0x398] sm:$0xf]
  %v1437 = vld [vmem:[%s5 + $0x39c] sm:$0xf]
  %v1438 = vld [vmem:[%s5 + $0x3a0] sm:$0xf]
  %v1439 = vld [vmem:[%s5 + $0x3a4] sm:$0xf]
  %v1440 = vld [vmem:[%s5 + $0x3a8] sm:$0xf]
  %v1441 = vld [vmem:[%s5 + $0x3ac] sm:$0xf]
  %v1442 = vld [vmem:[%s5 + $0x3b0] sm:$0xf]
  %v1443 = vld [vmem:[%s5 + $0x3b4] sm:$0xf]
  %v1444 = vld [vmem:[%s5 + $0x3b8] sm:$0xf]
  %v1445 = vld [vmem:[%s5 + $0x3bc] sm:$0xf]
  %v1446 = vld [vmem:[%s5 + $0x3c0] sm:$0xf]
  %v1447 = vld [vmem:[%s5 + $0x3c4] sm:$0xf]
  %v1448 = vld [vmem:[%s5 + $0x3c8] sm:$0xf]
  %v1449 = vld [vmem:[%s5 + $0x3cc] sm:$0xf]
  %v1450 = vld [vmem:[%s5 + $0x3d0] sm:$0xf]
  %v1451 = vld [vmem:[%s5 + $0x3d4] sm:$0xf]
  %v1452 = vld [vmem:[%s5 + $0x3d8] sm:$0xf]
  %v1453 = vld [vmem:[%s5 + $0x3dc] sm:$0xf]
  %v1454 = vld [vmem:[%s5 + $0x3e0] sm:$0xf]
  %v1455 = vld [vmem:[%s5 + $0x3e4] sm:$0xf]
  %v1456 = vld [vmem:[%s5 + $0x3e8] sm:$0xf]
  %v1457 = vld [vmem:[%s5 + $0x3ec] sm:$0xf]
  %v1458 = vld [vmem:[%s5 + $0x3f0] sm:$0xf]
  %v1459 = vld [vmem:[%s5 + $0x3f4] sm:$0xf]
  %v1460 = vld [vmem:[%s5 + $0x3f8] sm:$0xf]
  %v1461 = vld [vmem:[%s5 + $0x3fc] sm:$0xf]
  %v1462 = vlaneseq
  %v1463 = vshrl.u32 %v1462, 7
  %v1464 = vsub.s32 4, %v1463
  %v1465 = vrot.slane %v40, %v1464
  %v1722 = vunpack.c.l.b16 %v1206
  %v1723 = vunpack.c.l.b16 %v1207
  %v1724 = vunpack.c.l.b16 %v1208
  %v1725 = vunpack.c.l.b16 %v1209
  %v1726 = vunpack.c.l.b16 %v1210
  %v1727 = vunpack.c.l.b16 %v1211
  %v1728 = vunpack.c.l.b16 %v1212
  %v1729 = vunpack.c.l.b16 %v1213
  %v1730 = vunpack.c.l.b16 %v1214
  %v1731 = vunpack.c.l.b16 %v1215
  %v1732 = vunpack.c.l.b16 %v1216
  %v1733 = vunpack.c.l.b16 %v1217
  %v1734 = vunpack.c.l.b16 %v1218
  %v1735 = vunpack.c.l.b16 %v1219
  %v1736 = vunpack.c.l.b16 %v1220
  %v1737 = vunpack.c.l.b16 %v1221
  %v1738 = vunpack.c.l.b16 %v1222
  %v1739 = vunpack.c.l.b16 %v1223
  %v1740 = vunpack.c.l.b16 %v1224
  %v1741 = vunpack.c.l.b16 %v1225
  %v1742 = vunpack.c.l.b16 %v1226
  %v1743 = vunpack.c.l.b16 %v1227
  %v1744 = vunpack.c.l.b16 %v1228
  %v1745 = vunpack.c.l.b16 %v1229
  %v1746 = vunpack.c.l.b16 %v1230
  %v1747 = vunpack.c.l.b16 %v1231
  %v1748 = vunpack.c.l.b16 %v1232
  %v1749 = vunpack.c.l.b16 %v1233
  %v1750 = vunpack.c.l.b16 %v1234
  %v1751 = vunpack.c.l.b16 %v1235
  %v1752 = vunpack.c.l.b16 %v1236
  %v1753 = vunpack.c.l.b16 %v1237
  %v1754 = vunpack.c.l.b16 %v1238
  %v1755 = vunpack.c.l.b16 %v1239
  %v1756 = vunpack.c.l.b16 %v1240
  %v1757 = vunpack.c.l.b16 %v1241
  %v1758 = vunpack.c.l.b16 %v1242
  %v1759 = vunpack.c.l.b16 %v1243
  %v1760 = vunpack.c.l.b16 %v1244
  %v1761 = vunpack.c.l.b16 %v1245
  %v1762 = vunpack.c.l.b16 %v1246
  %v1763 = vunpack.c.l.b16 %v1247
  %v1764 = vunpack.c.l.b16 %v1248
  %v1765 = vunpack.c.l.b16 %v1249
  %v1766 = vunpack.c.l.b16 %v1250
  %v1767 = vunpack.c.l.b16 %v1251
  %v1768 = vunpack.c.l.b16 %v1252
  %v1769 = vunpack.c.l.b16 %v1253
  %v1770 = vunpack.c.l.b16 %v1254
  %v1771 = vunpack.c.l.b16 %v1255
  %v1772 = vunpack.c.l.b16 %v1256
  %v1773 = vunpack.c.l.b16 %v1257
  %v1774 = vunpack.c.l.b16 %v1258
  %v1775 = vunpack.c.l.b16 %v1259
  %v1776 = vunpack.c.l.b16 %v1260
  %v1777 = vunpack.c.l.b16 %v1261
  %v1778 = vunpack.c.l.b16 %v1262
  %v1779 = vunpack.c.l.b16 %v1263
  %v1780 = vunpack.c.l.b16 %v1264
  %v1781 = vunpack.c.l.b16 %v1265
  %v1782 = vunpack.c.l.b16 %v1266
  %v1783 = vunpack.c.l.b16 %v1267
  %v1784 = vunpack.c.l.b16 %v1268
  %v1785 = vunpack.c.l.b16 %v1269
  %v1786 = vunpack.c.l.b16 %v1270
  %v1787 = vunpack.c.l.b16 %v1271
  %v1788 = vunpack.c.l.b16 %v1272
  %v1789 = vunpack.c.l.b16 %v1273
  %v1790 = vunpack.c.l.b16 %v1274
  %v1791 = vunpack.c.l.b16 %v1275
  %v1792 = vunpack.c.l.b16 %v1276
  %v1793 = vunpack.c.l.b16 %v1277
  %v1794 = vunpack.c.l.b16 %v1278
  %v1795 = vunpack.c.l.b16 %v1279
  %v1796 = vunpack.c.l.b16 %v1280
  %v1797 = vunpack.c.l.b16 %v1281
  %v1798 = vunpack.c.l.b16 %v1282
  %v1799 = vunpack.c.l.b16 %v1283
  %v1800 = vunpack.c.l.b16 %v1284
  %v1801 = vunpack.c.l.b16 %v1285
  %v1802 = vunpack.c.l.b16 %v1286
  %v1803 = vunpack.c.l.b16 %v1287
  %v1804 = vunpack.c.l.b16 %v1288
  %v1805 = vunpack.c.l.b16 %v1289
  %v1806 = vunpack.c.l.b16 %v1290
  %v1807 = vunpack.c.l.b16 %v1291
  %v1808 = vunpack.c.l.b16 %v1292
  %v1809 = vunpack.c.l.b16 %v1293
  %v1810 = vunpack.c.l.b16 %v1294
  %v1811 = vunpack.c.l.b16 %v1295
  %v1812 = vunpack.c.l.b16 %v1296
  %v1813 = vunpack.c.l.b16 %v1297
  %v1814 = vunpack.c.l.b16 %v1298
  %v1815 = vunpack.c.l.b16 %v1299
  %v1816 = vunpack.c.l.b16 %v1300
  %v1817 = vunpack.c.l.b16 %v1301
  %v1818 = vunpack.c.l.b16 %v1302
  %v1819 = vunpack.c.l.b16 %v1303
  %v1820 = vunpack.c.l.b16 %v1304
  %v1821 = vunpack.c.l.b16 %v1305
  %v1822 = vunpack.c.l.b16 %v1306
  %v1823 = vunpack.c.l.b16 %v1307
  %v1824 = vunpack.c.l.b16 %v1308
  %v1825 = vunpack.c.l.b16 %v1309
  %v1826 = vunpack.c.l.b16 %v1310
  %v1827 = vunpack.c.l.b16 %v1311
  %v1828 = vunpack.c.l.b16 %v1312
  %v1829 = vunpack.c.l.b16 %v1313
  %v1830 = vunpack.c.l.b16 %v1314
  %v1831 = vunpack.c.l.b16 %v1315
  %v1832 = vunpack.c.l.b16 %v1316
  %v1833 = vunpack.c.l.b16 %v1317
  %v1834 = vunpack.c.l.b16 %v1318
  %v1835 = vunpack.c.l.b16 %v1319
  %v1836 = vunpack.c.l.b16 %v1320
  %v1837 = vunpack.c.l.b16 %v1321
  %v1838 = vunpack.c.l.b16 %v1322
  %v1839 = vunpack.c.l.b16 %v1323
  %v1840 = vunpack.c.l.b16 %v1324
  %v1841 = vunpack.c.l.b16 %v1325
  %v1842 = vunpack.c.l.b16 %v1326
  %v1843 = vunpack.c.l.b16 %v1327
  %v1844 = vunpack.c.l.b16 %v1328
  %v1845 = vunpack.c.l.b16 %v1329
  %v1846 = vunpack.c.l.b16 %v1330
  %v1847 = vunpack.c.l.b16 %v1331
  %v1848 = vunpack.c.l.b16 %v1332
  %v1849 = vunpack.c.l.b16 %v1333
  %v1850 = vunpack.c.l.b16 %v1334
  %v1851 = vunpack.c.l.b16 %v1335
  %v1852 = vunpack.c.l.b16 %v1336
  %v1853 = vunpack.c.l.b16 %v1337
  %v1854 = vunpack.c.l.b16 %v1338
  %v1855 = vunpack.c.l.b16 %v1339
  %v1856 = vunpack.c.l.b16 %v1340
  %v1857 = vunpack.c.l.b16 %v1341
  %v1858 = vunpack.c.l.b16 %v1342
  %v1859 = vunpack.c.l.b16 %v1343
  %v1860 = vunpack.c.l.b16 %v1344
  %v1861 = vunpack.c.l.b16 %v1345
  %v1862 = vunpack.c.l.b16 %v1346
  %v1863 = vunpack.c.l.b16 %v1347
  %v1864 = vunpack.c.l.b16 %v1348
  %v1865 = vunpack.c.l.b16 %v1349
  %v1866 = vunpack.c.l.b16 %v1350
  %v1867 = vunpack.c.l.b16 %v1351
  %v1868 = vunpack.c.l.b16 %v1352
  %v1869 = vunpack.c.l.b16 %v1353
  %v1870 = vunpack.c.l.b16 %v1354
  %v1871 = vunpack.c.l.b16 %v1355
  %v1872 = vunpack.c.l.b16 %v1356
  %v1873 = vunpack.c.l.b16 %v1357
  %v1874 = vunpack.c.l.b16 %v1358
  %v1875 = vunpack.c.l.b16 %v1359
  %v1876 = vunpack.c.l.b16 %v1360
  %v1877 = vunpack.c.l.b16 %v1361
  %v1878 = vunpack.c.l.b16 %v1362
  %v1879 = vunpack.c.l.b16 %v1363
  %v1880 = vunpack.c.l.b16 %v1364
  %v1881 = vunpack.c.l.b16 %v1365
  %v1882 = vunpack.c.l.b16 %v1366
  %v1883 = vunpack.c.l.b16 %v1367
  %v1884 = vunpack.c.l.b16 %v1368
  %v1885 = vunpack.c.l.b16 %v1369
  %v1886 = vunpack.c.l.b16 %v1370
  %v1887 = vunpack.c.l.b16 %v1371
  %v1888 = vunpack.c.l.b16 %v1372
  %v1889 = vunpack.c.l.b16 %v1373
  %v1890 = vunpack.c.l.b16 %v1374
  %v1891 = vunpack.c.l.b16 %v1375
  %v1892 = vunpack.c.l.b16 %v1376
  %v1893 = vunpack.c.l.b16 %v1377
  %v1894 = vunpack.c.l.b16 %v1378
  %v1895 = vunpack.c.l.b16 %v1379
  %v1896 = vunpack.c.l.b16 %v1380
  %v1897 = vunpack.c.l.b16 %v1381
  %v1898 = vunpack.c.l.b16 %v1382
  %v1899 = vunpack.c.l.b16 %v1383
  %v1900 = vunpack.c.l.b16 %v1384
  %v1901 = vunpack.c.l.b16 %v1385
  %v1902 = vunpack.c.l.b16 %v1386
  %v1903 = vunpack.c.l.b16 %v1387
  %v1904 = vunpack.c.l.b16 %v1388
  %v1905 = vunpack.c.l.b16 %v1389
  %v1906 = vunpack.c.l.b16 %v1390
  %v1907 = vunpack.c.l.b16 %v1391
  %v1908 = vunpack.c.l.b16 %v1392
  %v1909 = vunpack.c.l.b16 %v1393
  %v1910 = vunpack.c.l.b16 %v1394
  %v1911 = vunpack.c.l.b16 %v1395
  %v1912 = vunpack.c.l.b16 %v1396
  %v1913 = vunpack.c.l.b16 %v1397
  %v1914 = vunpack.c.l.b16 %v1398
  %v1915 = vunpack.c.l.b16 %v1399
  %v1916 = vunpack.c.l.b16 %v1400
  %v1917 = vunpack.c.l.b16 %v1401
  %v1918 = vunpack.c.l.b16 %v1402
  %v1919 = vunpack.c.l.b16 %v1403
  %v1920 = vunpack.c.l.b16 %v1404
  %v1921 = vunpack.c.l.b16 %v1405
  %v1922 = vunpack.c.l.b16 %v1406
  %v1923 = vunpack.c.l.b16 %v1407
  %v1924 = vunpack.c.l.b16 %v1408
  %v1925 = vunpack.c.l.b16 %v1409
  %v1926 = vunpack.c.l.b16 %v1410
  %v1927 = vunpack.c.l.b16 %v1411
  %v1928 = vunpack.c.l.b16 %v1412
  %v1929 = vunpack.c.l.b16 %v1413
  %v1930 = vunpack.c.l.b16 %v1414
  %v1931 = vunpack.c.l.b16 %v1415
  %v1932 = vunpack.c.l.b16 %v1416
  %v1933 = vunpack.c.l.b16 %v1417
  %v1934 = vunpack.c.l.b16 %v1418
  %v1935 = vunpack.c.l.b16 %v1419
  %v1936 = vunpack.c.l.b16 %v1420
  %v1937 = vunpack.c.l.b16 %v1421
  %v1938 = vunpack.c.l.b16 %v1422
  %v1939 = vunpack.c.l.b16 %v1423
  %v1940 = vunpack.c.l.b16 %v1424
  %v1941 = vunpack.c.l.b16 %v1425
  %v1942 = vunpack.c.l.b16 %v1426
  %v1943 = vunpack.c.l.b16 %v1427
  %v1944 = vunpack.c.l.b16 %v1428
  %v1945 = vunpack.c.l.b16 %v1429
  %v1946 = vunpack.c.l.b16 %v1430
  %v1947 = vunpack.c.l.b16 %v1431
  %v1948 = vunpack.c.l.b16 %v1432
  %v1949 = vunpack.c.l.b16 %v1433
  %v1950 = vunpack.c.l.b16 %v1434
  %v1951 = vunpack.c.l.b16 %v1435
  %v1952 = vunpack.c.l.b16 %v1436
  %v1953 = vunpack.c.l.b16 %v1437
  %v1954 = vunpack.c.l.b16 %v1438
  %v1955 = vunpack.c.l.b16 %v1439
  %v1956 = vunpack.c.l.b16 %v1440
  %v1957 = vunpack.c.l.b16 %v1441
  %v1958 = vunpack.c.l.b16 %v1442
  %v1959 = vunpack.c.l.b16 %v1443
  %v1960 = vunpack.c.l.b16 %v1444
  %v1961 = vunpack.c.l.b16 %v1445
  %v1962 = vunpack.c.l.b16 %v1446
  %v1963 = vunpack.c.l.b16 %v1447
  %v1964 = vunpack.c.l.b16 %v1448
  %v1965 = vunpack.c.l.b16 %v1449
  %v1966 = vunpack.c.l.b16 %v1450
  %v1967 = vunpack.c.l.b16 %v1451
  %v1968 = vunpack.c.l.b16 %v1452
  %v1969 = vunpack.c.l.b16 %v1453
  %v1970 = vunpack.c.l.b16 %v1454
  %v1971 = vunpack.c.l.b16 %v1455
  %v1972 = vunpack.c.l.b16 %v1456
  %v1973 = vunpack.c.l.b16 %v1457
  %v1974 = vunpack.c.l.b16 %v1458
  %v1975 = vunpack.c.l.b16 %v1459
  %v1976 = vunpack.c.l.b16 %v1460
  %v1977 = vunpack.c.l.b16 %v1461
  %v1978 = vpack.c.b16 %v1723, %v1722
  %v1979 = vpack.c.b16 %v1725, %v1724
  %v1980 = vpack.c.b16 %v1727, %v1726
  %v1981 = vpack.c.b16 %v1729, %v1728
  %v1982 = vpack.c.b16 %v1731, %v1730
  %v1983 = vpack.c.b16 %v1733, %v1732
  %v1984 = vpack.c.b16 %v1735, %v1734
  %v1985 = vpack.c.b16 %v1737, %v1736
  %v1986 = vpack.c.b16 %v1739, %v1738
  %v1987 = vpack.c.b16 %v1741, %v1740
  %v1988 = vpack.c.b16 %v1743, %v1742
  %v1989 = vpack.c.b16 %v1745, %v1744
  %v1990 = vpack.c.b16 %v1747, %v1746
  %v1991 = vpack.c.b16 %v1749, %v1748
  %v1992 = vpack.c.b16 %v1751, %v1750
  %v1993 = vpack.c.b16 %v1753, %v1752
  %v1994 = vpack.c.b16 %v1755, %v1754
  %v1995 = vpack.c.b16 %v1757, %v1756
  %v1996 = vpack.c.b16 %v1759, %v1758
  %v1997 = vpack.c.b16 %v1761, %v1760
  %v1998 = vpack.c.b16 %v1763, %v1762
  %v1999 = vpack.c.b16 %v1765, %v1764
  %v2000 = vpack.c.b16 %v1767, %v1766
  %v2001 = vpack.c.b16 %v1769, %v1768
  %v2002 = vpack.c.b16 %v1771, %v1770
  %v2003 = vpack.c.b16 %v1773, %v1772
  %v2004 = vpack.c.b16 %v1775, %v1774
  %v2005 = vpack.c.b16 %v1777, %v1776
  %v2006 = vpack.c.b16 %v1779, %v1778
  %v2007 = vpack.c.b16 %v1781, %v1780
  %v2008 = vpack.c.b16 %v1783, %v1782
  %v2009 = vpack.c.b16 %v1785, %v1784
  %v2010 = vpack.c.b16 %v1787, %v1786
  %v2011 = vpack.c.b16 %v1789, %v1788
  %v2012 = vpack.c.b16 %v1791, %v1790
  %v2013 = vpack.c.b16 %v1793, %v1792
  %v2014 = vpack.c.b16 %v1795, %v1794
  %v2015 = vpack.c.b16 %v1797, %v1796
  %v2016 = vpack.c.b16 %v1799, %v1798
  %v2017 = vpack.c.b16 %v1801, %v1800
  %v2018 = vpack.c.b16 %v1803, %v1802
  %v2019 = vpack.c.b16 %v1805, %v1804
  %v2020 = vpack.c.b16 %v1807, %v1806
  %v2021 = vpack.c.b16 %v1809, %v1808
  %v2022 = vpack.c.b16 %v1811, %v1810
  %v2023 = vpack.c.b16 %v1813, %v1812
  %v2024 = vpack.c.b16 %v1815, %v1814
  %v2025 = vpack.c.b16 %v1817, %v1816
  %v2026 = vpack.c.b16 %v1819, %v1818
  %v2027 = vpack.c.b16 %v1821, %v1820
  %v2028 = vpack.c.b16 %v1823, %v1822
  %v2029 = vpack.c.b16 %v1825, %v1824
  %v2030 = vpack.c.b16 %v1827, %v1826
  %v2031 = vpack.c.b16 %v1829, %v1828
  %v2032 = vpack.c.b16 %v1831, %v1830
  %v2033 = vpack.c.b16 %v1833, %v1832
  %v2034 = vpack.c.b16 %v1835, %v1834
  %v2035 = vpack.c.b16 %v1837, %v1836
  %v2036 = vpack.c.b16 %v1839, %v1838
  %v2037 = vpack.c.b16 %v1841, %v1840
  %v2038 = vpack.c.b16 %v1843, %v1842
  %v2039 = vpack.c.b16 %v1845, %v1844
  %v2040 = vpack.c.b16 %v1847, %v1846
  %v2041 = vpack.c.b16 %v1849, %v1848
  %v2042 = vpack.c.b16 %v1851, %v1850
  %v2043 = vpack.c.b16 %v1853, %v1852
  %v2044 = vpack.c.b16 %v1855, %v1854
  %v2045 = vpack.c.b16 %v1857, %v1856
  %v2046 = vpack.c.b16 %v1859, %v1858
  %v2047 = vpack.c.b16 %v1861, %v1860
  %v2048 = vpack.c.b16 %v1863, %v1862
  %v2049 = vpack.c.b16 %v1865, %v1864
  %v2050 = vpack.c.b16 %v1867, %v1866
  %v2051 = vpack.c.b16 %v1869, %v1868
  %v2052 = vpack.c.b16 %v1871, %v1870
  %v2053 = vpack.c.b16 %v1873, %v1872
  %v2054 = vpack.c.b16 %v1875, %v1874
  %v2055 = vpack.c.b16 %v1877, %v1876
  %v2056 = vpack.c.b16 %v1879, %v1878
  %v2057 = vpack.c.b16 %v1881, %v1880
  %v2058 = vpack.c.b16 %v1883, %v1882
  %v2059 = vpack.c.b16 %v1885, %v1884
  %v2060 = vpack.c.b16 %v1887, %v1886
  %v2061 = vpack.c.b16 %v1889, %v1888
  %v2062 = vpack.c.b16 %v1891, %v1890
  %v2063 = vpack.c.b16 %v1893, %v1892
  %v2064 = vpack.c.b16 %v1895, %v1894
  %v2065 = vpack.c.b16 %v1897, %v1896
  %v2066 = vpack.c.b16 %v1899, %v1898
  %v2067 = vpack.c.b16 %v1901, %v1900
  %v2068 = vpack.c.b16 %v1903, %v1902
  %v2069 = vpack.c.b16 %v1905, %v1904
  %v2070 = vpack.c.b16 %v1907, %v1906
  %v2071 = vpack.c.b16 %v1909, %v1908
  %v2072 = vpack.c.b16 %v1911, %v1910
  %v2073 = vpack.c.b16 %v1913, %v1912
  %v2074 = vpack.c.b16 %v1915, %v1914
  %v2075 = vpack.c.b16 %v1917, %v1916
  %v2076 = vpack.c.b16 %v1919, %v1918
  %v2077 = vpack.c.b16 %v1921, %v1920
  %v2078 = vpack.c.b16 %v1923, %v1922
  %v2079 = vpack.c.b16 %v1925, %v1924
  %v2080 = vpack.c.b16 %v1927, %v1926
  %v2081 = vpack.c.b16 %v1929, %v1928
  %v2082 = vpack.c.b16 %v1931, %v1930
  %v2083 = vpack.c.b16 %v1933, %v1932
  %v2084 = vpack.c.b16 %v1935, %v1934
  %v2085 = vpack.c.b16 %v1937, %v1936
  %v2086 = vpack.c.b16 %v1939, %v1938
  %v2087 = vpack.c.b16 %v1941, %v1940
  %v2088 = vpack.c.b16 %v1943, %v1942
  %v2089 = vpack.c.b16 %v1945, %v1944
  %v2090 = vpack.c.b16 %v1947, %v1946
  %v2091 = vpack.c.b16 %v1949, %v1948
  %v2092 = vpack.c.b16 %v1951, %v1950
  %v2093 = vpack.c.b16 %v1953, %v1952
  %v2094 = vpack.c.b16 %v1955, %v1954
  %v2095 = vpack.c.b16 %v1957, %v1956
  %v2096 = vpack.c.b16 %v1959, %v1958
  %v2097 = vpack.c.b16 %v1961, %v1960
  %v2098 = vpack.c.b16 %v1963, %v1962
  %v2099 = vpack.c.b16 %v1965, %v1964
  %v2100 = vpack.c.b16 %v1967, %v1966
  %v2101 = vpack.c.b16 %v1969, %v1968
  %v2102 = vpack.c.b16 %v1971, %v1970
  %v2103 = vpack.c.b16 %v1973, %v1972
  %v2104 = vpack.c.b16 %v1975, %v1974
  %v2105 = vpack.c.b16 %v1977, %v1976
  %2234 = vmatprep.subr.bf16.mxu0 0
  %2235 = vmatpush1.bf16.msra.mxu0 %v1978
  %2236 = vmatprep.subr.bf16.mxu0 0
  %2237 = vmatpush1.bf16.msra.mxu0 %v1979
  %2238 = vmatprep.subr.bf16.mxu0 0
  %2239 = vmatpush1.bf16.msra.mxu0 %v1980
  %2240 = vmatprep.subr.bf16.mxu0 0
  %2241 = vmatpush1.bf16.msra.mxu0 %v1981
  %2242 = vmatprep.subr.bf16.mxu0 0
  %2243 = vmatpush1.bf16.msra.mxu0 %v1982
  %2244 = vmatprep.subr.bf16.mxu0 0
  %2245 = vmatpush1.bf16.msra.mxu0 %v1983
  %2246 = vmatprep.subr.bf16.mxu0 0
  %2247 = vmatpush1.bf16.msra.mxu0 %v1984
  %2248 = vmatprep.subr.bf16.mxu0 0
  %2249 = vmatpush1.bf16.msra.mxu0 %v1985
  %2250 = vmatprep.subr.bf16.mxu0 0
  %2251 = vmatpush1.bf16.msra.mxu0 %v1986
  %2252 = vmatprep.subr.bf16.mxu0 0
  %2253 = vmatpush1.bf16.msra.mxu0 %v1987
  %2254 = vmatprep.subr.bf16.mxu0 0
  %2255 = vmatpush1.bf16.msra.mxu0 %v1988
  %2256 = vmatprep.subr.bf16.mxu0 0
  %2257 = vmatpush1.bf16.msra.mxu0 %v1989
  %2258 = vmatprep.subr.bf16.mxu0 0
  %2259 = vmatpush1.bf16.msra.mxu0 %v1990
  %2260 = vmatprep.subr.bf16.mxu0 0
  %2261 = vmatpush1.bf16.msra.mxu0 %v1991
  %2262 = vmatprep.subr.bf16.mxu0 0
  %2263 = vmatpush1.bf16.msra.mxu0 %v1992
  %2264 = vmatprep.subr.bf16.mxu0 0
  %2265 = vmatpush1.bf16.msra.mxu0 %v1993
  %2266 = vmatprep.mubr.bf16.mxu0 %v1191
  %2267 = vmatmul.mubr.bf16.gmra.mrb[0].mxu0 %v1190
  %v2268 = vpop.f32.mrb[0].mxu0
  %v2269 = vadd.f32 %v1465, %v2268
  %v2270 = vpop.f32.mrb[0].mxu0
  %v2271 = vpop.f32.mrb[0].mxu0
  %v2272 = vadd.f32 %v1465, %v2271
  %v2273 = vpop.f32.mrb[0].mxu0
  %2274 = vdwg.mxu0
  %2275 = vmatprep.subr.bf16.mxu0 0
  %2276 = vmatpush1.bf16.msra.mxu0 %v1994
  %2277 = vmatprep.subr.bf16.mxu0 0
  %2278 = vmatpush1.bf16.msra.mxu0 %v1995
  %2279 = vmatprep.subr.bf16.mxu0 0
  %2280 = vmatpush1.bf16.msra.mxu0 %v1996
  %2281 = vmatprep.subr.bf16.mxu0 0
  %2282 = vmatpush1.bf16.msra.mxu0 %v1997
  %2283 = vmatprep.subr.bf16.mxu0 0
  %2284 = vmatpush1.bf16.msra.mxu0 %v1998
  %2285 = vmatprep.subr.bf16.mxu0 0
  %2286 = vmatpush1.bf16.msra.mxu0 %v1999
  %2287 = vmatprep.subr.bf16.mxu0 0
  %2288 = vmatpush1.bf16.msra.mxu0 %v2000
  %2289 = vmatprep.subr.bf16.mxu0 0
  %2290 = vmatpush1.bf16.msra.mxu0 %v2001
  %2291 = vmatprep.subr.bf16.mxu0 0
  %2292 = vmatpush1.bf16.msra.mxu0 %v2002
  %2293 = vmatprep.subr.bf16.mxu0 0
  %2294 = vmatpush1.bf16.msra.mxu0 %v2003
  %2295 = vmatprep.subr.bf16.mxu0 0
  %2296 = vmatpush1.bf16.msra.mxu0 %v2004
  %2297 = vmatprep.subr.bf16.mxu0 0
  %2298 = vmatpush1.bf16.msra.mxu0 %v2005
  %2299 = vmatprep.subr.bf16.mxu0 0
  %2300 = vmatpush1.bf16.msra.mxu0 %v2006
  %2301 = vmatprep.subr.bf16.mxu0 0
  %2302 = vmatpush1.bf16.msra.mxu0 %v2007
  %2303 = vmatprep.subr.bf16.mxu0 0
  %2304 = vmatpush1.bf16.msra.mxu0 %v2008
  %2305 = vmatprep.subr.bf16.mxu0 0
  %2306 = vmatpush1.bf16.msra.mxu0 %v2009
  %2307 = vmatprep.mubr.bf16.mxu0 %v1193
  %2308 = vmatmul.mubr.bf16.gmra.mrb[0].mxu0 %v1192
  %v2309 = vpop.f32.mrb[0].mxu0
  %v2310 = vadd.f32 %v2269, %v2309
  %v2311 = vpop.f32.mrb[0].mxu0
  %v2312 = vpop.f32.mrb[0].mxu0
  %v2313 = vadd.f32 %v2272, %v2312
  %v2314 = vpop.f32.mrb[0].mxu0
  %2315 = vdwg.mxu0
  %2316 = vmatprep.subr.bf16.mxu0 0
  %2317 = vmatpush1.bf16.msra.mxu0 %v2010
  %2318 = vmatprep.subr.bf16.mxu0 0
  %2319 = vmatpush1.bf16.msra.mxu0 %v2011
  %2320 = vmatprep.subr.bf16.mxu0 0
  %2321 = vmatpush1.bf16.msra.mxu0 %v2012
  %2322 = vmatprep.subr.bf16.mxu0 0
  %2323 = vmatpush1.bf16.msra.mxu0 %v2013
  %2324 = vmatprep.subr.bf16.mxu0 0
  %2325 = vmatpush1.bf16.msra.mxu0 %v2014
  %2326 = vmatprep.subr.bf16.mxu0 0
  %2327 = vmatpush1.bf16.msra.mxu0 %v2015
  %2328 = vmatprep.subr.bf16.mxu0 0
  %2329 = vmatpush1.bf16.msra.mxu0 %v2016
  %2330 = vmatprep.subr.bf16.mxu0 0
  %2331 = vmatpush1.bf16.msra.mxu0 %v2017
  %2332 = vmatprep.subr.bf16.mxu0 0
  %2333 = vmatpush1.bf16.msra.mxu0 %v2018
  %2334 = vmatprep.subr.bf16.mxu0 0
  %2335 = vmatpush1.bf16.msra.mxu0 %v2019
  %2336 = vmatprep.subr.bf16.mxu0 0
  %2337 = vmatpush1.bf16.msra.mxu0 %v2020
  %2338 = vmatprep.subr.bf16.mxu0 0
  %2339 = vmatpush1.bf16.msra.mxu0 %v2021
  %2340 = vmatprep.subr.bf16.mxu0 0
  %2341 = vmatpush1.bf16.msra.mxu0 %v2022
  %2342 = vmatprep.subr.bf16.mxu0 0
  %2343 = vmatpush1.bf16.msra.mxu0 %v2023
  %2344 = vmatprep.subr.bf16.mxu0 0
  %2345 = vmatpush1.bf16.msra.mxu0 %v2024
  %2346 = vmatprep.subr.bf16.mxu0 0
  %2347 = vmatpush1.bf16.msra.mxu0 %v2025
  %2348 = vmatprep.mubr.bf16.mxu0 %v1195
  %2349 = vmatmul.mubr.bf16.gmra.mrb[0].mxu0 %v1194
  %v2350 = vpop.f32.mrb[0].mxu0
  %v2351 = vadd.f32 %v2310, %v2350
  %v2352 = vpop.f32.mrb[0].mxu0
  %v2353 = vpop.f32.mrb[0].mxu0
  %v2354 = vadd.f32 %v2313, %v2353
  %v2355 = vpop.f32.mrb[0].mxu0
  %2356 = vdwg.mxu0
  %2357 = vmatprep.subr.bf16.mxu0 0
  %2358 = vmatpush1.bf16.msra.mxu0 %v2026
  %2359 = vmatprep.subr.bf16.mxu0 0
  %2360 = vmatpush1.bf16.msra.mxu0 %v2027
  %2361 = vmatprep.subr.bf16.mxu0 0
  %2362 = vmatpush1.bf16.msra.mxu0 %v2028
  %2363 = vmatprep.subr.bf16.mxu0 0
  %2364 = vmatpush1.bf16.msra.mxu0 %v2029
  %2365 = vmatprep.subr.bf16.mxu0 0
  %2366 = vmatpush1.bf16.msra.mxu0 %v2030
  %2367 = vmatprep.subr.bf16.mxu0 0
  %2368 = vmatpush1.bf16.msra.mxu0 %v2031
  %2369 = vmatprep.subr.bf16.mxu0 0
  %2370 = vmatpush1.bf16.msra.mxu0 %v2032
  %2371 = vmatprep.subr.bf16.mxu0 0
  %2372 = vmatpush1.bf16.msra.mxu0 %v2033
  %2373 = vmatprep.subr.bf16.mxu0 0
  %2374 = vmatpush1.bf16.msra.mxu0 %v2034
  %2375 = vmatprep.subr.bf16.mxu0 0
  %2376 = vmatpush1.bf16.msra.mxu0 %v2035
  %2377 = vmatprep.subr.bf16.mxu0 0
  %2378 = vmatpush1.bf16.msra.mxu0 %v2036
  %2379 = vmatprep.subr.bf16.mxu0 0
  %2380 = vmatpush1.bf16.msra.mxu0 %v2037
  %2381 = vmatprep.subr.bf16.mxu0 0
  %2382 = vmatpush1.bf16.msra.mxu0 %v2038
  %2383 = vmatprep.subr.bf16.mxu0 0
  %2384 = vmatpush1.bf16.msra.mxu0 %v2039
  %2385 = vmatprep.subr.bf16.mxu0 0
  %2386 = vmatpush1.bf16.msra.mxu0 %v2040
  %2387 = vmatprep.subr.bf16.mxu0 0
  %2388 = vmatpush1.bf16.msra.mxu0 %v2041
  %2389 = vmatprep.mubr.bf16.mxu0 %v1197
  %2390 = vmatmul.mubr.bf16.gmra.mrb[0].mxu0 %v1196
  %v2391 = vpop.f32.mrb[0].mxu0
  %v2392 = vadd.f32 %v2351, %v2391
  %v2393 = vpop.f32.mrb[0].mxu0
  %v2394 = vpop.f32.mrb[0].mxu0
  %v2395 = vadd.f32 %v2354, %v2394
  %v2396 = vpop.f32.mrb[0].mxu0
  %2397 = vdwg.mxu0
  %2398 = vmatprep.subr.bf16.mxu0 0
  %2399 = vmatpush1.bf16.msra.mxu0 %v2042
  %2400 = vmatprep.subr.bf16.mxu0 0
  %2401 = vmatpush1.bf16.msra.mxu0 %v2043
  %2402 = vmatprep.subr.bf16.mxu0 0
  %2403 = vmatpush1.bf16.msra.mxu0 %v2044
  %2404 = vmatprep.subr.bf16.mxu0 0
  %2405 = vmatpush1.bf16.msra.mxu0 %v2045
  %2406 = vmatprep.subr.bf16.mxu0 0
  %2407 = vmatpush1.bf16.msra.mxu0 %v2046
  %2408 = vmatprep.subr.bf16.mxu0 0
  %2409 = vmatpush1.bf16.msra.mxu0 %v2047
  %2410 = vmatprep.subr.bf16.mxu0 0
  %2411 = vmatpush1.bf16.msra.mxu0 %v2048
  %2412 = vmatprep.subr.bf16.mxu0 0
  %2413 = vmatpush1.bf16.msra.mxu0 %v2049
  %2414 = vmatprep.subr.bf16.mxu0 0
  %2415 = vmatpush1.bf16.msra.mxu0 %v2050
  %2416 = vmatprep.subr.bf16.mxu0 0
  %2417 = vmatpush1.bf16.msra.mxu0 %v2051
  %2418 = vmatprep.subr.bf16.mxu0 0
  %2419 = vmatpush1.bf16.msra.mxu0 %v2052
  %2420 = vmatprep.subr.bf16.mxu0 0
  %2421 = vmatpush1.bf16.msra.mxu0 %v2053
  %2422 = vmatprep.subr.bf16.mxu0 0
  %2423 = vmatpush1.bf16.msra.mxu0 %v2054
  %2424 = vmatprep.subr.bf16.mxu0 0
  %2425 = vmatpush1.bf16.msra.mxu0 %v2055
  %2426 = vmatprep.subr.bf16.mxu0 0
  %2427 = vmatpush1.bf16.msra.mxu0 %v2056
  %2428 = vmatprep.subr.bf16.mxu0 0
  %2429 = vmatpush1.bf16.msra.mxu0 %v2057
  %2430 = vmatprep.mubr.bf16.mxu0 %v1199
  %2431 = vmatmul.mubr.bf16.gmra.mrb[0].mxu0 %v1198
  %v2432 = vpop.f32.mrb[0].mxu0
  %v2433 = vadd.f32 %v2392, %v2432
  %v2434 = vpop.f32.mrb[0].mxu0
  %v2435 = vpop.f32.mrb[0].mxu0
  %v2436 = vadd.f32 %v2395, %v2435
  %v2437 = vpop.f32.mrb[0].mxu0
  %2438 = vdwg.mxu0
  %2439 = vmatprep.subr.bf16.mxu0 0
  %2440 = vmatpush1.bf16.msra.mxu0 %v2058
  %2441 = vmatprep.subr.bf16.mxu0 0
  %2442 = vmatpush1.bf16.msra.mxu0 %v2059
  %2443 = vmatprep.subr.bf16.mxu0 0
  %2444 = vmatpush1.bf16.msra.mxu0 %v2060
  %2445 = vmatprep.subr.bf16.mxu0 0
  %2446 = vmatpush1.bf16.msra.mxu0 %v2061
  %2447 = vmatprep.subr.bf16.mxu0 0
  %2448 = vmatpush1.bf16.msra.mxu0 %v2062
  %2449 = vmatprep.subr.bf16.mxu0 0
  %2450 = vmatpush1.bf16.msra.mxu0 %v2063
  %2451 = vmatprep.subr.bf16.mxu0 0
  %2452 = vmatpush1.bf16.msra.mxu0 %v2064
  %2453 = vmatprep.subr.bf16.mxu0 0
  %2454 = vmatpush1.bf16.msra.mxu0 %v2065
  %2455 = vmatprep.subr.bf16.mxu0 0
  %2456 = vmatpush1.bf16.msra.mxu0 %v2066
  %2457 = vmatprep.subr.bf16.mxu0 0
  %2458 = vmatpush1.bf16.msra.mxu0 %v2067
  %2459 = vmatprep.subr.bf16.mxu0 0
  %2460 = vmatpush1.bf16.msra.mxu0 %v2068
  %2461 = vmatprep.subr.bf16.mxu0 0
  %2462 = vmatpush1.bf16.msra.mxu0 %v2069
  %2463 = vmatprep.subr.bf16.mxu0 0
  %2464 = vmatpush1.bf16.msra.mxu0 %v2070
  %2465 = vmatprep.subr.bf16.mxu0 0
  %2466 = vmatpush1.bf16.msra.mxu0 %v2071
  %2467 = vmatprep.subr.bf16.mxu0 0
  %2468 = vmatpush1.bf16.msra.mxu0 %v2072
  %2469 = vmatprep.subr.bf16.mxu0 0
  %2470 = vmatpush1.bf16.msra.mxu0 %v2073
  %2471 = vmatprep.mubr.bf16.mxu0 %v1201
  %2472 = vmatmul.mubr.bf16.gmra.mrb[0].mxu0 %v1200
  %v2473 = vpop.f32.mrb[0].mxu0
  %v2474 = vadd.f32 %v2433, %v2473
  %v2475 = vpop.f32.mrb[0].mxu0
  %v2476 = vpop.f32.mrb[0].mxu0
  %v2477 = vadd.f32 %v2436, %v2476
  %v2478 = vpop.f32.mrb[0].mxu0
  %2479 = vdwg.mxu0
  %2480 = vmatprep.subr.bf16.mxu0 0
  %2481 = vmatpush1.bf16.msra.mxu0 %v2074
  %2482 = vmatprep.subr.bf16.mxu0 0
  %2483 = vmatpush1.bf16.msra.mxu0 %v2075
  %2484 = vmatprep.subr.bf16.mxu0 0
  %2485 = vmatpush1.bf16.msra.mxu0 %v2076
  %2486 = vmatprep.subr.bf16.mxu0 0
  %2487 = vmatpush1.bf16.msra.mxu0 %v2077
  %2488 = vmatprep.subr.bf16.mxu0 0
  %2489 = vmatpush1.bf16.msra.mxu0 %v2078
  %2490 = vmatprep.subr.bf16.mxu0 0
  %2491 = vmatpush1.bf16.msra.mxu0 %v2079
  %2492 = vmatprep.subr.bf16.mxu0 0
  %2493 = vmatpush1.bf16.msra.mxu0 %v2080
  %2494 = vmatprep.subr.bf16.mxu0 0
  %2495 = vmatpush1.bf16.msra.mxu0 %v2081
  %2496 = vmatprep.subr.bf16.mxu0 0
  %2497 = vmatpush1.bf16.msra.mxu0 %v2082
  %2498 = vmatprep.subr.bf16.mxu0 0
  %2499 = vmatpush1.bf16.msra.mxu0 %v2083
  %2500 = vmatprep.subr.bf16.mxu0 0
  %2501 = vmatpush1.bf16.msra.mxu0 %v2084
  %2502 = vmatprep.subr.bf16.mxu0 0
  %2503 = vmatpush1.bf16.msra.mxu0 %v2085
  %2504 = vmatprep.subr.bf16.mxu0 0
  %2505 = vmatpush1.bf16.msra.mxu0 %v2086
  %2506 = vmatprep.subr.bf16.mxu0 0
  %2507 = vmatpush1.bf16.msra.mxu0 %v2087
  %2508 = vmatprep.subr.bf16.mxu0 0
  %2509 = vmatpush1.bf16.msra.mxu0 %v2088
  %2510 = vmatprep.subr.bf16.mxu0 0
  %2511 = vmatpush1.bf16.msra.mxu0 %v2089
  %2512 = vmatprep.mubr.bf16.mxu0 %v1203
  %2513 = vmatmul.mubr.bf16.gmra.mrb[0].mxu0 %v1202
  %v2514 = vpop.f32.mrb[0].mxu0
  %v2515 = vadd.f32 %v2474, %v2514
  %v2516 = vpop.f32.mrb[0].mxu0
  %v2517 = vpop.f32.mrb[0].mxu0
  %v2518 = vadd.f32 %v2477, %v2517
  %v2519 = vpop.f32.mrb[0].mxu0
  %2520 = vdwg.mxu0
  %2521 = vmatprep.subr.bf16.mxu0 0
  %2522 = vmatpush1.bf16.msra.mxu0 %v2090
  %2523 = vmatprep.subr.bf16.mxu0 0
  %2524 = vmatpush1.bf16.msra.mxu0 %v2091
  %2525 = vmatprep.subr.bf16.mxu0 0
  %2526 = vmatpush1.bf16.msra.mxu0 %v2092
  %2527 = vmatprep.subr.bf16.mxu0 0
  %2528 = vmatpush1.bf16.msra.mxu0 %v2093
  %2529 = vmatprep.subr.bf16.mxu0 0
  %2530 = vmatpush1.bf16.msra.mxu0 %v2094
  %2531 = vmatprep.subr.bf16.mxu0 0
  %2532 = vmatpush1.bf16.msra.mxu0 %v2095
  %2533 = vmatprep.subr.bf16.mxu0 0
  %2534 = vmatpush1.bf16.msra.mxu0 %v2096
  %2535 = vmatprep.subr.bf16.mxu0 0
  %2536 = vmatpush1.bf16.msra.mxu0 %v2097
  %2537 = vmatprep.subr.bf16.mxu0 0
  %2538 = vmatpush1.bf16.msra.mxu0 %v2098
  %2539 = vmatprep.subr.bf16.mxu0 0
  %2540 = vmatpush1.bf16.msra.mxu0 %v2099
  %2541 = vmatprep.subr.bf16.mxu0 0
  %2542 = vmatpush1.bf16.msra.mxu0 %v2100
  %2543 = vmatprep.subr.bf16.mxu0 0
  %2544 = vmatpush1.bf16.msra.mxu0 %v2101
  %2545 = vmatprep.subr.bf16.mxu0 0
  %2546 = vmatpush1.bf16.msra.mxu0 %v2102
  %2547 = vmatprep.subr.bf16.mxu0 0
  %2548 = vmatpush1.bf16.msra.mxu0 %v2103
  %2549 = vmatprep.subr.bf16.mxu0 0
  %2550 = vmatpush1.bf16.msra.mxu0 %v2104
  %2551 = vmatprep.subr.bf16.mxu0 0
  %2552 = vmatpush1.bf16.msra.mxu0 %v2105
  %2553 = vmatprep.mubr.bf16.mxu0 %v1205
  %2554 = vmatmul.mubr.bf16.gmra.mrb[0].mxu0 %v1204
  %v2555 = vpop.f32.mrb[0].mxu0
  %v2556 = vadd.f32 %v2515, %v2555
  %v2557 = vpop.f32.mrb[0].mxu0
  %v2558 = vpop.f32.mrb[0].mxu0
  %v2559 = vadd.f32 %v2518, %v2558
  %v2560 = vpop.f32.mrb[0].mxu0
  %2561 = vdwg.mxu0
  %v2562 = vadd.f32 %v532, %v2556
  %v2563 = vadd.f32 %v533, %v2559
  %v2564 = vsel %vm185, %v2562, 0.0
  %2565 = vadd.xlane.f32.xlu0 %v2564
  %v2566 = vpop.xlane.xlu0 %2565
  %v2567 = vsel %vm185, %v2563, 0.0
  %2568 = vadd.xlane.f32.xlu0 %v2567
  %v2569 = vpop.xlane.xlu0 %2568
  %v2570 = vmul.f32 %v2566, %v501
  %v2571 = vmul.f32 %v2569, %v501
  %v2572 = vsub.f32 %v2562, %v2570
  %v2573 = vsub.f32 %v2563, %v2571
  %v2574 = vmul.f32 %v2572, %v2572
  %v2575 = vmul.f32 %v2573, %v2573
  %v2576 = vsel %vm185, %v2574, 0.0
  %2577 = vadd.xlane.f32.xlu0 %v2576
  %v2578 = vpop.xlane.xlu0 %2577
  %v2579 = vsel %vm185, %v2575, 0.0
  %2580 = vadd.xlane.f32.xlu0 %v2579
  %v2581 = vpop.xlane.xlu0 %2580
  %v2582 = vmul.f32 %v2578, %v501
  %v2583 = vmul.f32 %v2581, %v501
  %v2584 = vadd.f32 %v2582, 1e-05
  %v2585 = vadd.f32 %v2583, 1e-05
  %v2586 = vrsqrt.pop %v2584
  %v2587 = vrsqrt.pop %v2585
  %v2588 = vmul.f32 %v2572, %v2586
  %v2589 = vmul.f32 %v2573, %v2587
  %v2590 = vlaneseq
  %v2591 = vshrl.u32 %v2590, 7
  %v2592 = vsub.s32 5, %v2591
  %v2593 = vrot.slane %v40, %v2592
  %v2595 = vsel %vm185, %v2588, 0
  %v2598 = vsel %vm185, %v2589, 0
  %2600 = vmatprep.subr.mxu0 0.0
  %2601 = vmatpush1.msra.mxu0 %v36
  %2602 = vmatprep.subr.mxu0 0.0
  %2603 = vmatpush1.msra.mxu0 %v37
  %2604 = vmatprep.subr.mxu0 0.0
  %2605 = vmatpush1.msra.mxu0 %v38
  %2606 = vmatprep.subr.mxu0 0.0
  %2607 = vmatpush1.msra.mxu0 %v39
  %2608 = vmatprep.subr.mxu0 0.0
  %2609 = vmatpush1.msra.mxu0 0.0
  %2610 = vmatprep.subr.mxu0 0.0
  %2611 = vmatpush1.msra.mxu0 0.0
  %2612 = vmatprep.subr.mxu0 0.0
  %2613 = vmatpush1.msra.mxu0 0.0
  %2614 = vmatprep.subr.mxu0 0.0
  %2615 = vmatpush1.msra.mxu0 0.0
  %2616 = vmatprep.subr.mxu0 0.0
  %2617 = vmatpush1.msra.mxu0 0.0
  %2618 = vmatprep.subr.mxu0 0.0
  %2619 = vmatpush1.msra.mxu0 0.0
  %2620 = vmatprep.subr.mxu0 0.0
  %2621 = vmatpush1.msra.mxu0 0.0
  %2622 = vmatprep.subr.mxu0 0.0
  %2623 = vmatpush1.msra.mxu0 0.0
  %2624 = vmatprep.subr.mxu0 0.0
  %2625 = vmatpush1.msra.mxu0 0.0
  %2626 = vmatprep.subr.mxu0 0.0
  %2627 = vmatpush1.msra.mxu0 0.0
  %2628 = vmatprep.subr.mxu0 0.0
  %2629 = vmatpush1.msra.mxu0 0.0
  %2630 = vmatprep.subr.mxu0 0.0
  %2631 = vmatpush1.msra.mxu0 0.0
  %2632 = vmatprep.subr.mxu0 0.0
  %2633 = vmatpush1.msra.mxu0 0.0
  %2634 = vmatprep.subr.mxu0 0.0
  %2635 = vmatpush1.msra.mxu0 0.0
  %2636 = vmatprep.subr.mxu0 0.0
  %2637 = vmatpush1.msra.mxu0 0.0
  %2638 = vmatprep.subr.mxu0 0.0
  %2639 = vmatpush1.msra.mxu0 0.0
  %2640 = vmatprep.subr.mxu0 0.0
  %2641 = vmatpush1.msra.mxu0 0.0
  %2642 = vmatprep.subr.mxu0 0.0
  %2643 = vmatpush1.msra.mxu0 0.0
  %2644 = vmatprep.subr.mxu0 0.0
  %2645 = vmatpush1.msra.mxu0 0.0
  %2646 = vmatprep.subr.mxu0 0.0
  %2647 = vmatpush1.msra.mxu0 0.0
  %2648 = vmatprep.subr.mxu0 0.0
  %2649 = vmatpush1.msra.mxu0 0.0
  %2650 = vmatprep.subr.mxu0 0.0
  %2651 = vmatpush1.msra.mxu0 0.0
  %2652 = vmatprep.subr.mxu0 0.0
  %2653 = vmatpush1.msra.mxu0 0.0
  %2654 = vmatprep.subr.mxu0 0.0
  %2655 = vmatpush1.msra.mxu0 0.0
  %2656 = vmatprep.subr.mxu0 0.0
  %2657 = vmatpush1.msra.mxu0 0.0
  %2658 = vmatprep.subr.mxu0 0.0
  %2659 = vmatpush1.msra.mxu0 0.0
  %2660 = vmatprep.subr.mxu0 0.0
  %2661 = vmatpush1.msra.mxu0 0.0
  %2662 = vmatprep.subr.mxu0 0.0
  %2663 = vmatpush1.msra.mxu0 0.0
  %2664 = vmatprep.mubr.f32.mxu0 0.0
  %2665 = vmatmul.mubr.f32.gmra.mrb[0].mxu0 %v2595
  %v2666 = vpop.f32.mrb[0].mxu0
  %v2667 = vadd.f32 %v2593, %v2666
  %v2668 = vpop.f32.mrb[0].mxu0
  %2669 = vmatprep.mubr.f32.mxu0 0.0
  %2670 = vmatmul.mubr.f32.gmra.mrb[0].mxu0 %v2598
  %v2671 = vpop.f32.mrb[0].mxu0
  %v2672 = vadd.f32 %v2593, %v2671
  %v2673 = vpop.f32.mrb[0].mxu0
  %2674 = vdwg.mxu0
  %2675 = vst [vmem:[%s6] sm:$0xff] %v2667
  %2676 = vst [vmem:[%s6 + $0x8] sm:$0xff] %v2672
  // Predicated region
  $region26: #{minimal_transformer.1} parent=0 // pred_check
    _
  $region27: #{minimal_transformer.1} parent=0 // pred_check_branch
    %2678 = sbr.rel (0) target = $region29
  $region28: #{minimal_transformer.1} parent=0 // pred_region
    _
  $region29: #{minimal_transformer.1} parent=0 // pred_fallthru
    _
  // Predicated region
  $region30: #{minimal_transformer.1} parent=0 // pred_check
    _
  $region31: #{minimal_transformer.1} parent=0 // pred_check_branch
    %2680 = sbr.rel (0) target = $region33
  $region32: #{minimal_transformer.1} parent=0 // pred_region
    _
  $region33: #{minimal_transformer.1} parent=0 // pred_fallthru
    _

</llo_original>
